<compile_context>
chip_gen: v6e
topology: v6e:2x2x1
jax: 0.10.0
libtpu: 0.0.40
codegen_flags: <defaults>
</compile_context>

<pallas_src>
import functools
import math

import jax
import jax.numpy as jnp
from jax import lax
from jax.experimental import pallas as pl
from jax.experimental.pallas import tpu as pltpu


def _lstm_kernel(x_ref,      # (T*B, D)   time-major flattened input
                 wih0_ref,   # (D, 4H)    layer-0 input weights (transposed, ifo-scaled)
                 b0_ref,     # (1, 4H)    b_ih0 + b_hh0 (ifo-scaled)
                 wf_ref,     # (2H, 8H)   fused [[Whh0, Wih1], [0, Whh1]] (ifo-scaled)
                 b1_ref,     # (1, 4H)    b_ih1 + b_hh1 (ifo-scaled)
                 wfc_ref,    # (H, OP)    lane-padded fc weight (zeros in pad lanes)
                 bfc_ref,    # (1, OP)    lane-padded fc bias (-1e30 in pad lanes)
                 out_ref,    # (B, OP)    softmax probabilities (pad lanes -> 0)
                 pre0_ref,   # scratch (T*B, 4H): hoisted layer-0 input projection
                 *, hidden_dim, batch, seq_len):
    H, B, T = hidden_dim, batch, seq_len

    # Hoisted layer-0 input projection: no recurrent dependency, one big MXU op.
    pre0_ref[...] = (
        jnp.dot(x_ref[...], wih0_ref[...], preferred_element_type=jnp.float32)
        + b0_ref[...])

    w_fused = wf_ref[...]
    b1b = jnp.broadcast_to(b1_ref[...], (B, 4 * H))   # broadcast hoisted out of loop

    # Lane mask selecting the "g" (cell candidate, tanh) gate block [2H, 3H).
    lane = lax.broadcasted_iota(jnp.int32, (B, 4 * H), 1)
    g_lanes = (lane >= 2 * H) & (lane < 3 * H)

    def cell_update(gates, c):
        # i/f/o pre-activations carry a folded 0.5 scale, so one EUP tanh covers all
        # gates:  sigmoid(z) = 0.5 * tanh(0.5 z) + 0.5.
        t = jnp.tanh(gates)
        act = jnp.where(g_lanes, t, 0.5 * t + 0.5)
        i = act[:, 0 * H:1 * H]
        f = act[:, 1 * H:2 * H]
        g = act[:, 2 * H:3 * H]
        o = act[:, 3 * H:4 * H]
        c_new = f * c + i * g
        h_new = o * jnp.tanh(c_new)
        return h_new, c_new

    def step(t, carry):
        h1, c0, c1, recur0 = carry
        # Layer 0: hoisted input projection + carried recurrent term (zero at t=0).
        row = pl.multiple_of(t * B, B)
        gates0 = pre0_ref[pl.ds(row, B), :] + recur0
        h0, c0 = cell_update(gates0, c0)
        # Single block-structured matmul yields the layer-1 pre-gates for this step AND
        # the layer-0 recurrent term for the next step.
        m = jnp.dot(jnp.concatenate([h0, h1], axis=-1), w_fused,
                    preferred_element_type=jnp.float32)        # (B, 8H)
        recur0 = m[:, :4 * H]                                  # h0_t @ Whh0
        gates1 = m[:, 4 * H:] + b1b                            # h0_t@Wih1 + h1@Whh1 + b1
        h1, c1 = cell_update(gates1, c1)
        return (h1, c0, c1, recur0)

    zh = jnp.zeros((B, H), dtype=jnp.float32)
    zg = jnp.zeros((B, 4 * H), dtype=jnp.float32)
    h1, _, _, _ = lax.fori_loop(0, T, step, (zh, zh, zh, zg), unroll=True)

    # fc on the last timestep's top-layer hidden state, then stable softmax.
    logits = (jnp.dot(h1, wfc_ref[...], preferred_element_type=jnp.float32)
              + bfc_ref[...])
    z = logits - jnp.max(logits, axis=-1, keepdims=True)
    e = jnp.exp(z)                  # pad lanes have bias -1e30 -> exp == 0 -> prob == 0
    out_ref[...] = e / jnp.sum(e, axis=-1, keepdims=True)      # exact divide (epilogue)


def lstm_forward(x, packed, *, hidden_dim, output_dim):
    """x: (B, T, D) float32.  Returns softmax probabilities (B, output_dim)."""
    B, T, D = x.shape
    OP = packed["wfc"].shape[1]                            # lane-padded class dim (128)
    x2d = jnp.transpose(x, (1, 0, 2)).reshape(T * B, D)    # time-major, flattened

    vmem = pl.BlockSpec(memory_space=pltpu.MemorySpace.VMEM)
    kernel = functools.partial(_lstm_kernel, hidden_dim=hidden_dim,
                               batch=B, seq_len=T)

    probs_padded = pl.pallas_call(
        kernel,
        out_shape=jax.ShapeDtypeStruct((B, OP), jnp.float32),
        in_specs=[vmem] * 7,
        out_specs=vmem,
        scratch_shapes=[pltpu.VMEM((T * B, 4 * hidden_dim), jnp.float32)],
    )(x2d, packed["wih0"], packed["b0"], packed["wf"], packed["b1"],
      packed["wfc"], packed["bfc"])
    return probs_padded[:, :output_dim]


def init_raw_params(key, input_dim, hidden_dim, output_dim):
    """PyTorch-layout parameters with PyTorch-style U(-1/sqrt(H), 1/sqrt(H)) init."""
    H, D, O = hidden_dim, input_dim, output_dim
    k = 1.0 / math.sqrt(H)
    keys = jax.random.split(key, 10)
    u = lambda kk, shape: jax.random.uniform(kk, shape, jnp.float32, -k, k)
    return dict(
        wih0=u(keys[0], (4 * H, D)), whh0=u(keys[1], (4 * H, H)),
        bih0=u(keys[2], (4 * H,)),   bhh0=u(keys[3], (4 * H,)),
        wih1=u(keys[4], (4 * H, H)), whh1=u(keys[5], (4 * H, H)),
        bih1=u(keys[6], (4 * H,)),   bhh1=u(keys[7], (4 * H,)),
        wfc=u(keys[8], (O, H)),      bfc=u(keys[9], (O,)),
    )


def pack_params(raw, hidden_dim, output_dim, *, lane_pad=128):
    """Transpose / fuse / gate-scale / lane-pad raw PyTorch-layout params for the kernel."""
    H, O = hidden_dim, output_dim
    # Fold a 0.5 scale into the sigmoid (i, f, o) gate columns so the kernel needs a
    # single tanh per cell:  sigmoid(z) = 0.5 * tanh(0.5 z) + 0.5.  g ([2H,3H)) unscaled.
    gate_scale = jnp.full((4 * H,), 0.5, jnp.float32).at[2 * H:3 * H].set(1.0)

    wih0 = raw["wih0"].T * gate_scale                      # (D, 4H)
    whh0 = raw["whh0"].T * gate_scale                      # (H, 4H)
    b0 = ((raw["bih0"] + raw["bhh0"]) * gate_scale)[None, :]
    wih1 = raw["wih1"].T * gate_scale                      # (H, 4H)
    whh1 = raw["whh1"].T * gate_scale                      # (H, 4H)
    b1 = ((raw["bih1"] + raw["bhh1"]) * gate_scale)[None, :]

    # Block-structured fused recurrent weight:
    #   concat([h0_t, h1_{t-1}]) @ wf = [ h0_t@Whh0 | h0_t@Wih1 + h1_{t-1}@Whh1 ]
    wf = jnp.concatenate(
        [jnp.concatenate([whh0, wih1], axis=1),
         jnp.concatenate([jnp.zeros((H, 4 * H), jnp.float32), whh1], axis=1)],
        axis=0)                                            # (2H, 8H)

    # Lane-pad the fc output dim to 128 for an unmasked, lane-dense output store.
    OP = max(lane_pad, O)
    wfc = jnp.zeros((H, OP), jnp.float32).at[:, :O].set(raw["wfc"].T)
    bfc = jnp.full((1, OP), -1e30, jnp.float32).at[:, :O].set(raw["bfc"])

    return dict(wih0=wih0, b0=b0, wf=wf, b1=b1, wfc=wfc, bfc=bfc)


def lstm_ref(x, raw, hidden_dim):
    """Pure-JAX reference of the PyTorch module (2-layer LSTM, eval) + fc + softmax."""
    B, T, _ = x.shape
    H = hidden_dim

    def cell(xt, h, c, wih, whh, bih, bhh):
        z = xt @ wih.T + bih + h @ whh.T + bhh
        i = jax.nn.sigmoid(z[:, 0 * H:1 * H])
        f = jax.nn.sigmoid(z[:, 1 * H:2 * H])
        g = jnp.tanh(z[:, 2 * H:3 * H])
        o = jax.nn.sigmoid(z[:, 3 * H:4 * H])
        c = f * c + i * g
        return o * jnp.tanh(c), c

    h0 = c0 = h1 = c1 = jnp.zeros((B, H), jnp.float32)
    for t in range(T):
        h0, c0 = cell(x[:, t], h0, c0,
                      raw["wih0"], raw["whh0"], raw["bih0"], raw["bhh0"])
        h1, c1 = cell(h0, h1, c1,
                      raw["wih1"], raw["whh1"], raw["bih1"], raw["bhh1"])
    logits = h1 @ raw["wfc"].T + raw["bfc"]
    return jax.nn.softmax(logits, axis=-1)


if __name__ == "__main__":
    # Shapes consistent with the module: LSTM(input_dim=16, hidden_dim=32,
    # num_layers=2, output_dim=4, taskType='classification'), batch=8, seq=8.
    input_dim, hidden_dim, num_layers, output_dim = 16, 32, 2, 4
    batch, seq = 8, 8

    key = jax.random.PRNGKey(0)
    pkey, xkey = jax.random.split(key)
    raw = init_raw_params(pkey, input_dim, hidden_dim, output_dim)
    packed = pack_params(raw, hidden_dim, output_dim)
    x = jax.random.normal(xkey, (batch, seq, input_dim), dtype=jnp.float32)

    probs = lstm_forward(x, packed, hidden_dim=hidden_dim, output_dim=output_dim)
    probs = jax.block_until_ready(probs)

    assert probs.shape == (batch, output_dim)
    assert bool(jnp.all(jnp.isfinite(probs)))
    # Exact-divide softmax: rows sum to 1 to f32 precision.
    assert bool(jnp.allclose(jnp.sum(probs, axis=-1), 1.0, atol=1e-3))
    # Parity with the pure-JAX reference of the PyTorch forward (eval semantics).
    ref = lstm_ref(x, raw, hidden_dim)
    assert bool(jnp.allclose(probs, ref, atol=2e-3, rtol=2e-3))

    print("KERNEL_OK")
</pallas_src>

<mosaic_0001>
module attributes {stable_mosaic.version = 11 : i64} {
  func.func @_lstm_kernel(%arg0: memref<64x16xf32, #tpu.memory_space<vmem>>, %arg1: memref<16x128xf32, #tpu.memory_space<vmem>>, %arg2: memref<1x128xf32, #tpu.memory_space<vmem>>, %arg3: memref<64x256xf32, #tpu.memory_space<vmem>>, %arg4: memref<1x128xf32, #tpu.memory_space<vmem>>, %arg5: memref<32x128xf32, #tpu.memory_space<vmem>>, %arg6: memref<1x128xf32, #tpu.memory_space<vmem>>, %arg7: memref<8x128xf32, #tpu.memory_space<vmem>>, %arg8: memref<64x128xf32, #tpu.memory_space<vmem>>) attributes {dimension_semantics = [], scalar_prefetch = 0 : i64, scratch_operands = 1 : i64, tpu.core_type = #tpu.core_type<tc>} {
    %c0 = arith.constant 0 : index
    %c0_0 = arith.constant 0 : index
    %0 = vector.load %arg0[%c0, %c0_0] : memref<64x16xf32, #tpu.memory_space<vmem>>, vector<64x16xf32>
    %c0_1 = arith.constant 0 : index
    %c0_2 = arith.constant 0 : index
    %1 = vector.load %arg1[%c0_1, %c0_2] : memref<16x128xf32, #tpu.memory_space<vmem>>, vector<16x128xf32>
    %cst = arith.constant dense<0.000000e+00> : vector<64x128xf32>
    %2 = tpu.matmul %0, %1, %cst {dimension_numbers = #tpu.dot_dimension_numbers<[1], [0], [0], [1], [0, 0, 1, 1], [], []>} : vector<64x16xf32>, vector<16x128xf32>, vector<64x128xf32> -> vector<64x128xf32>
    %c0_3 = arith.constant 0 : index
    %c0_4 = arith.constant 0 : index
    %3 = vector.load %arg2[%c0_3, %c0_4] : memref<1x128xf32, #tpu.memory_space<vmem>>, vector<1x128xf32>
    %4 = vector.broadcast %3 : vector<1x128xf32> to vector<64x128xf32>
    %5 = arith.addf %2, %4 : vector<64x128xf32>
    %c0_5 = arith.constant 0 : index
    %c0_6 = arith.constant 0 : index
    %6 = vector.load %arg8[%c0_5, %c0_6] : memref<64x128xf32, #tpu.memory_space<vmem>>, vector<64x128xf32>
    tpu.vector_store %arg8[%c0_5, %c0_6], %5 {strides = array<i32>} : memref<64x128xf32, #tpu.memory_space<vmem>>, vector<64x128xf32>,
    %c0_7 = arith.constant 0 : index
    %c0_8 = arith.constant 0 : index
    %7 = vector.load %arg3[%c0_7, %c0_8] : memref<64x256xf32, #tpu.memory_space<vmem>>, vector<64x256xf32>
    %c0_9 = arith.constant 0 : index
    %c0_10 = arith.constant 0 : index
    %8 = vector.load %arg4[%c0_9, %c0_10] : memref<1x128xf32, #tpu.memory_space<vmem>>, vector<1x128xf32>
    %9 = vector.shape_cast %8 : vector<1x128xf32> to vector<1x128xf32>
    %10 = vector.broadcast %9 : vector<1x128xf32> to vector<8x128xf32>
    %11 = tpu.iota {dimensions = array<i32: 1>} : vector<8x128xi32>
    %c64_i32 = arith.constant 64 : i32
    %12 = vector.broadcast %c64_i32 : i32 to vector<8x128xi32>
    %13 = arith.cmpi sge, %11, %12 : vector<8x128xi32>
    %c96_i32 = arith.constant 96 : i32
    %14 = vector.broadcast %c96_i32 : i32 to vector<8x128xi32>
    %15 = arith.cmpi slt, %11, %14 : vector<8x128xi32>
    %16 = arith.andi %13, %15 : vector<8x128xi1>
    %cst_11 = arith.constant 0.000000e+00 : f32
    %17 = vector.broadcast %cst_11 : f32 to vector<8x32xf32>
    %cst_12 = arith.constant 0.000000e+00 : f32
    %18 = vector.broadcast %cst_12 : f32 to vector<8x128xf32>
    %c0_i32 = arith.constant 0 : i32
    %c8_i32 = arith.constant 8 : i32
    %19 = arith.muli %c0_i32, %c8_i32 : i32
    %20 = tpu.assume_multiple %19, 8 : i32
    %21 = arith.index_cast %20 : i32 to index
    %c0_13 = arith.constant 0 : index
    %22 = vector.load %arg8[%21, %c0_13] : memref<64x128xf32, #tpu.memory_space<vmem>>, vector<8x128xf32>
    %23 = arith.addf %22, %18 : vector<8x128xf32>
    %24 = math.tanh %23 : vector<8x128xf32>
    %cst_14 = arith.constant 5.000000e-01 : f32
    %25 = vector.broadcast %cst_14 : f32 to vector<8x128xf32>
    %26 = arith.mulf %25, %24 : vector<8x128xf32>
    %cst_15 = arith.constant 5.000000e-01 : f32
    %27 = vector.broadcast %cst_15 : f32 to vector<8x128xf32>
    %28 = arith.addf %26, %27 : vector<8x128xf32>
    %29 = arith.select %16, %24, %28 : vector<8x128xi1>, vector<8x128xf32>
    %30 = vector.extract_strided_slice %29 {offsets = [0, 0], sizes = [8, 32], strides = [1, 1]} : vector<8x128xf32> to vector<8x32xf32>
    %31 = vector.extract_strided_slice %29 {offsets = [0, 32], sizes = [8, 32], strides = [1, 1]} : vector<8x128xf32> to vector<8x32xf32>
    %32 = vector.extract_strided_slice %29 {offsets = [0, 64], sizes = [8, 32], strides = [1, 1]} : vector<8x128xf32> to vector<8x32xf32>
    %33 = vector.extract_strided_slice %29 {offsets = [0, 96], sizes = [8, 32], strides = [1, 1]} : vector<8x128xf32> to vector<8x32xf32>
    %34 = arith.mulf %31, %17 : vector<8x32xf32>
    %35 = arith.mulf %30, %32 : vector<8x32xf32>
    %36 = arith.addf %34, %35 : vector<8x32xf32>
    %37 = math.tanh %36 : vector<8x32xf32>
    %38 = arith.mulf %33, %37 : vector<8x32xf32>
    %39 = tpu.concatenate %38, %17 in 1 : vector<8x32xf32>, vector<8x32xf32> -> vector<8x64xf32>
    %cst_16 = arith.constant dense<0.000000e+00> : vector<8x256xf32>
    %40 = tpu.matmul %39, %7, %cst_16 {dimension_numbers = #tpu.dot_dimension_numbers<[1], [0], [0], [1], [0, 0, 1, 1], [], []>} : vector<8x64xf32>, vector<64x256xf32>, vector<8x256xf32> -> vector<8x256xf32>
    %41 = vector.extract_strided_slice %40 {offsets = [0, 0], sizes = [8, 128], strides = [1, 1]} : vector<8x256xf32> to vector<8x128xf32>
    %42 = vector.extract_strided_slice %40 {offsets = [0, 128], sizes = [8, 128], strides = [1, 1]} : vector<8x256xf32> to vector<8x128xf32>
    %43 = arith.addf %42, %10 : vector<8x128xf32>
    %44 = math.tanh %43 : vector<8x128xf32>
    %cst_17 = arith.constant 5.000000e-01 : f32
    %45 = vector.broadcast %cst_17 : f32 to vector<8x128xf32>
    %46 = arith.mulf %45, %44 : vector<8x128xf32>
    %cst_18 = arith.constant 5.000000e-01 : f32
    %47 = vector.broadcast %cst_18 : f32 to vector<8x128xf32>
    %48 = arith.addf %46, %47 : vector<8x128xf32>
    %49 = arith.select %16, %44, %48 : vector<8x128xi1>, vector<8x128xf32>
    %50 = vector.extract_strided_slice %49 {offsets = [0, 0], sizes = [8, 32], strides = [1, 1]} : vector<8x128xf32> to vector<8x32xf32>
    %51 = vector.extract_strided_slice %49 {offsets = [0, 32], sizes = [8, 32], strides = [1, 1]} : vector<8x128xf32> to vector<8x32xf32>
    %52 = vector.extract_strided_slice %49 {offsets = [0, 64], sizes = [8, 32], strides = [1, 1]} : vector<8x128xf32> to vector<8x32xf32>
    %53 = vector.extract_strided_slice %49 {offsets = [0, 96], sizes = [8, 32], strides = [1, 1]} : vector<8x128xf32> to vector<8x32xf32>
    %54 = arith.mulf %51, %17 : vector<8x32xf32>
    %55 = arith.mulf %50, %52 : vector<8x32xf32>
    %56 = arith.addf %54, %55 : vector<8x32xf32>
    %57 = math.tanh %56 : vector<8x32xf32>
    %58 = arith.mulf %53, %57 : vector<8x32xf32>
    %c1_i32 = arith.constant 1 : i32
    %c8_i32_19 = arith.constant 8 : i32
    %59 = arith.muli %c1_i32, %c8_i32_19 : i32
    %60 = tpu.assume_multiple %59, 8 : i32
    %61 = arith.index_cast %60 : i32 to index
    %c0_20 = arith.constant 0 : index
    %62 = vector.load %arg8[%61, %c0_20] : memref<64x128xf32, #tpu.memory_space<vmem>>, vector<8x128xf32>
    %63 = arith.addf %62, %41 : vector<8x128xf32>
    %64 = math.tanh %63 : vector<8x128xf32>
    %cst_21 = arith.constant 5.000000e-01 : f32
    %65 = vector.broadcast %cst_21 : f32 to vector<8x128xf32>
    %66 = arith.mulf %65, %64 : vector<8x128xf32>
    %cst_22 = arith.constant 5.000000e-01 : f32
    %67 = vector.broadcast %cst_22 : f32 to vector<8x128xf32>
    %68 = arith.addf %66, %67 : vector<8x128xf32>
    %69 = arith.select %16, %64, %68 : vector<8x128xi1>, vector<8x128xf32>
    %70 = vector.extract_strided_slice %69 {offsets = [0, 0], sizes = [8, 32], strides = [1, 1]} : vector<8x128xf32> to vector<8x32xf32>
    %71 = vector.extract_strided_slice %69 {offsets = [0, 32], sizes = [8, 32], strides = [1, 1]} : vector<8x128xf32> to vector<8x32xf32>
    %72 = vector.extract_strided_slice %69 {offsets = [0, 64], sizes = [8, 32], strides = [1, 1]} : vector<8x128xf32> to vector<8x32xf32>
    %73 = vector.extract_strided_slice %69 {offsets = [0, 96], sizes = [8, 32], strides = [1, 1]} : vector<8x128xf32> to vector<8x32xf32>
    %74 = arith.mulf %71, %36 : vector<8x32xf32>
    %75 = arith.mulf %70, %72 : vector<8x32xf32>
    %76 = arith.addf %74, %75 : vector<8x32xf32>
    %77 = math.tanh %76 : vector<8x32xf32>
    %78 = arith.mulf %73, %77 : vector<8x32xf32>
    %79 = tpu.concatenate %78, %58 in 1 : vector<8x32xf32>, vector<8x32xf32> -> vector<8x64xf32>
    %cst_23 = arith.constant dense<0.000000e+00> : vector<8x256xf32>
    %80 = tpu.matmul %79, %7, %cst_23 {dimension_numbers = #tpu.dot_dimension_numbers<[1], [0], [0], [1], [0, 0, 1, 1], [], []>} : vector<8x64xf32>, vector<64x256xf32>, vector<8x256xf32> -> vector<8x256xf32>
    %81 = vector.extract_strided_slice %80 {offsets = [0, 0], sizes = [8, 128], strides = [1, 1]} : vector<8x256xf32> to vector<8x128xf32>
    %82 = vector.extract_strided_slice %80 {offsets = [0, 128], sizes = [8, 128], strides = [1, 1]} : vector<8x256xf32> to vector<8x128xf32>
    %83 = arith.addf %82, %10 : vector<8x128xf32>
    %84 = math.tanh %83 : vector<8x128xf32>
    %cst_24 = arith.constant 5.000000e-01 : f32
    %85 = vector.broadcast %cst_24 : f32 to vector<8x128xf32>
    %86 = arith.mulf %85, %84 : vector<8x128xf32>
    %cst_25 = arith.constant 5.000000e-01 : f32
    %87 = vector.broadcast %cst_25 : f32 to vector<8x128xf32>
    %88 = arith.addf %86, %87 : vector<8x128xf32>
    %89 = arith.select %16, %84, %88 : vector<8x128xi1>, vector<8x128xf32>
    %90 = vector.extract_strided_slice %89 {offsets = [0, 0], sizes = [8, 32], strides = [1, 1]} : vector<8x128xf32> to vector<8x32xf32>
    %91 = vector.extract_strided_slice %89 {offsets = [0, 32], sizes = [8, 32], strides = [1, 1]} : vector<8x128xf32> to vector<8x32xf32>
    %92 = vector.extract_strided_slice %89 {offsets = [0, 64], sizes = [8, 32], strides = [1, 1]} : vector<8x128xf32> to vector<8x32xf32>
    %93 = vector.extract_strided_slice %89 {offsets = [0, 96], sizes = [8, 32], strides = [1, 1]} : vector<8x128xf32> to vector<8x32xf32>
    %94 = arith.mulf %91, %56 : vector<8x32xf32>
    %95 = arith.mulf %90, %92 : vector<8x32xf32>
    %96 = arith.addf %94, %95 : vector<8x32xf32>
    %97 = math.tanh %96 : vector<8x32xf32>
    %98 = arith.mulf %93, %97 : vector<8x32xf32>
    %c2_i32 = arith.constant 2 : i32
    %c8_i32_26 = arith.constant 8 : i32
    %99 = arith.muli %c2_i32, %c8_i32_26 : i32
    %100 = tpu.assume_multiple %99, 8 : i32
    %101 = arith.index_cast %100 : i32 to index
    %c0_27 = arith.constant 0 : index
    %102 = vector.load %arg8[%101, %c0_27] : memref<64x128xf32, #tpu.memory_space<vmem>>, vector<8x128xf32>
    %103 = arith.addf %102, %81 : vector<8x128xf32>
    %104 = math.tanh %103 : vector<8x128xf32>
    %cst_28 = arith.constant 5.000000e-01 : f32
    %105 = vector.broadcast %cst_28 : f32 to vector<8x128xf32>
    %106 = arith.mulf %105, %104 : vector<8x128xf32>
    %cst_29 = arith.constant 5.000000e-01 : f32
    %107 = vector.broadcast %cst_29 : f32 to vector<8x128xf32>
    %108 = arith.addf %106, %107 : vector<8x128xf32>
    %109 = arith.select %16, %104, %108 : vector<8x128xi1>, vector<8x128xf32>
    %110 = vector.extract_strided_slice %109 {offsets = [0, 0], sizes = [8, 32], strides = [1, 1]} : vector<8x128xf32> to vector<8x32xf32>
    %111 = vector.extract_strided_slice %109 {offsets = [0, 32], sizes = [8, 32], strides = [1, 1]} : vector<8x128xf32> to vector<8x32xf32>
    %112 = vector.extract_strided_slice %109 {offsets = [0, 64], sizes = [8, 32], strides = [1, 1]} : vector<8x128xf32> to vector<8x32xf32>
    %113 = vector.extract_strided_slice %109 {offsets = [0, 96], sizes = [8, 32], strides = [1, 1]} : vector<8x128xf32> to vector<8x32xf32>
    %114 = arith.mulf %111, %76 : vector<8x32xf32>
    %115 = arith.mulf %110, %112 : vector<8x32xf32>
    %116 = arith.addf %114, %115 : vector<8x32xf32>
    %117 = math.tanh %116 : vector<8x32xf32>
    %118 = arith.mulf %113, %117 : vector<8x32xf32>
    %119 = tpu.concatenate %118, %98 in 1 : vector<8x32xf32>, vector<8x32xf32> -> vector<8x64xf32>
    %cst_30 = arith.constant dense<0.000000e+00> : vector<8x256xf32>
    %120 = tpu.matmul %119, %7, %cst_30 {dimension_numbers = #tpu.dot_dimension_numbers<[1], [0], [0], [1], [0, 0, 1, 1], [], []>} : vector<8x64xf32>, vector<64x256xf32>, vector<8x256xf32> -> vector<8x256xf32>
    %121 = vector.extract_strided_slice %120 {offsets = [0, 0], sizes = [8, 128], strides = [1, 1]} : vector<8x256xf32> to vector<8x128xf32>
    %122 = vector.extract_strided_slice %120 {offsets = [0, 128], sizes = [8, 128], strides = [1, 1]} : vector<8x256xf32> to vector<8x128xf32>
    %123 = arith.addf %122, %10 : vector<8x128xf32>
    %124 = math.tanh %123 : vector<8x128xf32>
    %cst_31 = arith.constant 5.000000e-01 : f32
    %125 = vector.broadcast %cst_31 : f32 to vector<8x128xf32>
    %126 = arith.mulf %125, %124 : vector<8x128xf32>
    %cst_32 = arith.constant 5.000000e-01 : f32
    %127 = vector.broadcast %cst_32 : f32 to vector<8x128xf32>
    %128 = arith.addf %126, %127 : vector<8x128xf32>
    %129 = arith.select %16, %124, %128 : vector<8x128xi1>, vector<8x128xf32>
    %130 = vector.extract_strided_slice %129 {offsets = [0, 0], sizes = [8, 32], strides = [1, 1]} : vector<8x128xf32> to vector<8x32xf32>
    %131 = vector.extract_strided_slice %129 {offsets = [0, 32], sizes = [8, 32], strides = [1, 1]} : vector<8x128xf32> to vector<8x32xf32>
    %132 = vector.extract_strided_slice %129 {offsets = [0, 64], sizes = [8, 32], strides = [1, 1]} : vector<8x128xf32> to vector<8x32xf32>
    %133 = vector.extract_strided_slice %129 {offsets = [0, 96], sizes = [8, 32], strides = [1, 1]} : vector<8x128xf32> to vector<8x32xf32>
    %134 = arith.mulf %131, %96 : vector<8x32xf32>
    %135 = arith.mulf %130, %132 : vector<8x32xf32>
    %136 = arith.addf %134, %135 : vector<8x32xf32>
    %137 = math.tanh %136 : vector<8x32xf32>
    %138 = arith.mulf %133, %137 : vector<8x32xf32>
    %c3_i32 = arith.constant 3 : i32
    %c8_i32_33 = arith.constant 8 : i32
    %139 = arith.muli %c3_i32, %c8_i32_33 : i32
    %140 = tpu.assume_multiple %139, 8 : i32
    %141 = arith.index_cast %140 : i32 to index
    %c0_34 = arith.constant 0 : index
    %142 = vector.load %arg8[%141, %c0_34] : memref<64x128xf32, #tpu.memory_space<vmem>>, vector<8x128xf32>
    %143 = arith.addf %142, %121 : vector<8x128xf32>
    %144 = math.tanh %143 : vector<8x128xf32>
    %cst_35 = arith.constant 5.000000e-01 : f32
    %145 = vector.broadcast %cst_35 : f32 to vector<8x128xf32>
    %146 = arith.mulf %145, %144 : vector<8x128xf32>
    %cst_36 = arith.constant 5.000000e-01 : f32
    %147 = vector.broadcast %cst_36 : f32 to vector<8x128xf32>
    %148 = arith.addf %146, %147 : vector<8x128xf32>
    %149 = arith.select %16, %144, %148 : vector<8x128xi1>, vector<8x128xf32>
    %150 = vector.extract_strided_slice %149 {offsets = [0, 0], sizes = [8, 32], strides = [1, 1]} : vector<8x128xf32> to vector<8x32xf32>
    %151 = vector.extract_strided_slice %149 {offsets = [0, 32], sizes = [8, 32], strides = [1, 1]} : vector<8x128xf32> to vector<8x32xf32>
    %152 = vector.extract_strided_slice %149 {offsets = [0, 64], sizes = [8, 32], strides = [1, 1]} : vector<8x128xf32> to vector<8x32xf32>
    %153 = vector.extract_strided_slice %149 {offsets = [0, 96], sizes = [8, 32], strides = [1, 1]} : vector<8x128xf32> to vector<8x32xf32>
    %154 = arith.mulf %151, %116 : vector<8x32xf32>
    %155 = arith.mulf %150, %152 : vector<8x32xf32>
    %156 = arith.addf %154, %155 : vector<8x32xf32>
    %157 = math.tanh %156 : vector<8x32xf32>
    %158 = arith.mulf %153, %157 : vector<8x32xf32>
    %159 = tpu.concatenate %158, %138 in 1 : vector<8x32xf32>, vector<8x32xf32> -> vector<8x64xf32>
    %cst_37 = arith.constant dense<0.000000e+00> : vector<8x256xf32>
    %160 = tpu.matmul %159, %7, %cst_37 {dimension_numbers = #tpu.dot_dimension_numbers<[1], [0], [0], [1], [0, 0, 1, 1], [], []>} : vector<8x64xf32>, vector<64x256xf32>, vector<8x256xf32> -> vector<8x256xf32>
    %161 = vector.extract_strided_slice %160 {offsets = [0, 0], sizes = [8, 128], strides = [1, 1]} : vector<8x256xf32> to vector<8x128xf32>
    %162 = vector.extract_strided_slice %160 {offsets = [0, 128], sizes = [8, 128], strides = [1, 1]} : vector<8x256xf32> to vector<8x128xf32>
    %163 = arith.addf %162, %10 : vector<8x128xf32>
    %164 = math.tanh %163 : vector<8x128xf32>
    %cst_38 = arith.constant 5.000000e-01 : f32
    %165 = vector.broadcast %cst_38 : f32 to vector<8x128xf32>
    %166 = arith.mulf %165, %164 : vector<8x128xf32>
    %cst_39 = arith.constant 5.000000e-01 : f32
    %167 = vector.broadcast %cst_39 : f32 to vector<8x128xf32>
    %168 = arith.addf %166, %167 : vector<8x128xf32>
    %169 = arith.select %16, %164, %168 : vector<8x128xi1>, vector<8x128xf32>
    %170 = vector.extract_strided_slice %169 {offsets = [0, 0], sizes = [8, 32], strides = [1, 1]} : vector<8x128xf32> to vector<8x32xf32>
    %171 = vector.extract_strided_slice %169 {offsets = [0, 32], sizes = [8, 32], strides = [1, 1]} : vector<8x128xf32> to vector<8x32xf32>
    %172 = vector.extract_strided_slice %169 {offsets = [0, 64], sizes = [8, 32], strides = [1, 1]} : vector<8x128xf32> to vector<8x32xf32>
    %173 = vector.extract_strided_slice %169 {offsets = [0, 96], sizes = [8, 32], strides = [1, 1]} : vector<8x128xf32> to vector<8x32xf32>
    %174 = arith.mulf %171, %136 : vector<8x32xf32>
    %175 = arith.mulf %170, %172 : vector<8x32xf32>
    %176 = arith.addf %174, %175 : vector<8x32xf32>
    %177 = math.tanh %176 : vector<8x32xf32>
    %178 = arith.mulf %173, %177 : vector<8x32xf32>
    %c4_i32 = arith.constant 4 : i32
    %c8_i32_40 = arith.constant 8 : i32
    %179 = arith.muli %c4_i32, %c8_i32_40 : i32
    %180 = tpu.assume_multiple %179, 8 : i32
    %181 = arith.index_cast %180 : i32 to index
    %c0_41 = arith.constant 0 : index
    %182 = vector.load %arg8[%181, %c0_41] : memref<64x128xf32, #tpu.memory_space<vmem>>, vector<8x128xf32>
    %183 = arith.addf %182, %161 : vector<8x128xf32>
    %184 = math.tanh %183 : vector<8x128xf32>
    %cst_42 = arith.constant 5.000000e-01 : f32
    %185 = vector.broadcast %cst_42 : f32 to vector<8x128xf32>
    %186 = arith.mulf %185, %184 : vector<8x128xf32>
    %cst_43 = arith.constant 5.000000e-01 : f32
    %187 = vector.broadcast %cst_43 : f32 to vector<8x128xf32>
    %188 = arith.addf %186, %187 : vector<8x128xf32>
    %189 = arith.select %16, %184, %188 : vector<8x128xi1>, vector<8x128xf32>
    %190 = vector.extract_strided_slice %189 {offsets = [0, 0], sizes = [8, 32], strides = [1, 1]} : vector<8x128xf32> to vector<8x32xf32>
    %191 = vector.extract_strided_slice %189 {offsets = [0, 32], sizes = [8, 32], strides = [1, 1]} : vector<8x128xf32> to vector<8x32xf32>
    %192 = vector.extract_strided_slice %189 {offsets = [0, 64], sizes = [8, 32], strides = [1, 1]} : vector<8x128xf32> to vector<8x32xf32>
    %193 = vector.extract_strided_slice %189 {offsets = [0, 96], sizes = [8, 32], strides = [1, 1]} : vector<8x128xf32> to vector<8x32xf32>
    %194 = arith.mulf %191, %156 : vector<8x32xf32>
    %195 = arith.mulf %190, %192 : vector<8x32xf32>
    %196 = arith.addf %194, %195 : vector<8x32xf32>
    %197 = math.tanh %196 : vector<8x32xf32>
    %198 = arith.mulf %193, %197 : vector<8x32xf32>
    %199 = tpu.concatenate %198, %178 in 1 : vector<8x32xf32>, vector<8x32xf32> -> vector<8x64xf32>
    %cst_44 = arith.constant dense<0.000000e+00> : vector<8x256xf32>
    %200 = tpu.matmul %199, %7, %cst_44 {dimension_numbers = #tpu.dot_dimension_numbers<[1], [0], [0], [1], [0, 0, 1, 1], [], []>} : vector<8x64xf32>, vector<64x256xf32>, vector<8x256xf32> -> vector<8x256xf32>
    %201 = vector.extract_strided_slice %200 {offsets = [0, 0], sizes = [8, 128], strides = [1, 1]} : vector<8x256xf32> to vector<8x128xf32>
    %202 = vector.extract_strided_slice %200 {offsets = [0, 128], sizes = [8, 128], strides = [1, 1]} : vector<8x256xf32> to vector<8x128xf32>
    %203 = arith.addf %202, %10 : vector<8x128xf32>
    %204 = math.tanh %203 : vector<8x128xf32>
    %cst_45 = arith.constant 5.000000e-01 : f32
    %205 = vector.broadcast %cst_45 : f32 to vector<8x128xf32>
    %206 = arith.mulf %205, %204 : vector<8x128xf32>
    %cst_46 = arith.constant 5.000000e-01 : f32
    %207 = vector.broadcast %cst_46 : f32 to vector<8x128xf32>
    %208 = arith.addf %206, %207 : vector<8x128xf32>
    %209 = arith.select %16, %204, %208 : vector<8x128xi1>, vector<8x128xf32>
    %210 = vector.extract_strided_slice %209 {offsets = [0, 0], sizes = [8, 32], strides = [1, 1]} : vector<8x128xf32> to vector<8x32xf32>
    %211 = vector.extract_strided_slice %209 {offsets = [0, 32], sizes = [8, 32], strides = [1, 1]} : vector<8x128xf32> to vector<8x32xf32>
    %212 = vector.extract_strided_slice %209 {offsets = [0, 64], sizes = [8, 32], strides = [1, 1]} : vector<8x128xf32> to vector<8x32xf32>
    %213 = vector.extract_strided_slice %209 {offsets = [0, 96], sizes = [8, 32], strides = [1, 1]} : vector<8x128xf32> to vector<8x32xf32>
    %214 = arith.mulf %211, %176 : vector<8x32xf32>
    %215 = arith.mulf %210, %212 : vector<8x32xf32>
    %216 = arith.addf %214, %215 : vector<8x32xf32>
    %217 = math.tanh %216 : vector<8x32xf32>
    %218 = arith.mulf %213, %217 : vector<8x32xf32>
    %c5_i32 = arith.constant 5 : i32
    %c8_i32_47 = arith.constant 8 : i32
    %219 = arith.muli %c5_i32, %c8_i32_47 : i32
    %220 = tpu.assume_multiple %219, 8 : i32
    %221 = arith.index_cast %220 : i32 to index
    %c0_48 = arith.constant 0 : index
    %222 = vector.load %arg8[%221, %c0_48] : memref<64x128xf32, #tpu.memory_space<vmem>>, vector<8x128xf32>
    %223 = arith.addf %222, %201 : vector<8x128xf32>
    %224 = math.tanh %223 : vector<8x128xf32>
    %cst_49 = arith.constant 5.000000e-01 : f32
    %225 = vector.broadcast %cst_49 : f32 to vector<8x128xf32>
    %226 = arith.mulf %225, %224 : vector<8x128xf32>
    %cst_50 = arith.constant 5.000000e-01 : f32
    %227 = vector.broadcast %cst_50 : f32 to vector<8x128xf32>
    %228 = arith.addf %226, %227 : vector<8x128xf32>
    %229 = arith.select %16, %224, %228 : vector<8x128xi1>, vector<8x128xf32>
    %230 = vector.extract_strided_slice %229 {offsets = [0, 0], sizes = [8, 32], strides = [1, 1]} : vector<8x128xf32> to vector<8x32xf32>
    %231 = vector.extract_strided_slice %229 {offsets = [0, 32], sizes = [8, 32], strides = [1, 1]} : vector<8x128xf32> to vector<8x32xf32>
    %232 = vector.extract_strided_slice %229 {offsets = [0, 64], sizes = [8, 32], strides = [1, 1]} : vector<8x128xf32> to vector<8x32xf32>
    %233 = vector.extract_strided_slice %229 {offsets = [0, 96], sizes = [8, 32], strides = [1, 1]} : vector<8x128xf32> to vector<8x32xf32>
    %234 = arith.mulf %231, %196 : vector<8x32xf32>
    %235 = arith.mulf %230, %232 : vector<8x32xf32>
    %236 = arith.addf %234, %235 : vector<8x32xf32>
    %237 = math.tanh %236 : vector<8x32xf32>
    %238 = arith.mulf %233, %237 : vector<8x32xf32>
    %239 = tpu.concatenate %238, %218 in 1 : vector<8x32xf32>, vector<8x32xf32> -> vector<8x64xf32>
    %cst_51 = arith.constant dense<0.000000e+00> : vector<8x256xf32>
    %240 = tpu.matmul %239, %7, %cst_51 {dimension_numbers = #tpu.dot_dimension_numbers<[1], [0], [0], [1], [0, 0, 1, 1], [], []>} : vector<8x64xf32>, vector<64x256xf32>, vector<8x256xf32> -> vector<8x256xf32>
    %241 = vector.extract_strided_slice %240 {offsets = [0, 0], sizes = [8, 128], strides = [1, 1]} : vector<8x256xf32> to vector<8x128xf32>
    %242 = vector.extract_strided_slice %240 {offsets = [0, 128], sizes = [8, 128], strides = [1, 1]} : vector<8x256xf32> to vector<8x128xf32>
    %243 = arith.addf %242, %10 : vector<8x128xf32>
    %244 = math.tanh %243 : vector<8x128xf32>
    %cst_52 = arith.constant 5.000000e-01 : f32
    %245 = vector.broadcast %cst_52 : f32 to vector<8x128xf32>
    %246 = arith.mulf %245, %244 : vector<8x128xf32>
    %cst_53 = arith.constant 5.000000e-01 : f32
    %247 = vector.broadcast %cst_53 : f32 to vector<8x128xf32>
    %248 = arith.addf %246, %247 : vector<8x128xf32>
    %249 = arith.select %16, %244, %248 : vector<8x128xi1>, vector<8x128xf32>
    %250 = vector.extract_strided_slice %249 {offsets = [0, 0], sizes = [8, 32], strides = [1, 1]} : vector<8x128xf32> to vector<8x32xf32>
    %251 = vector.extract_strided_slice %249 {offsets = [0, 32], sizes = [8, 32], strides = [1, 1]} : vector<8x128xf32> to vector<8x32xf32>
    %252 = vector.extract_strided_slice %249 {offsets = [0, 64], sizes = [8, 32], strides = [1, 1]} : vector<8x128xf32> to vector<8x32xf32>
    %253 = vector.extract_strided_slice %249 {offsets = [0, 96], sizes = [8, 32], strides = [1, 1]} : vector<8x128xf32> to vector<8x32xf32>
    %254 = arith.mulf %251, %216 : vector<8x32xf32>
    %255 = arith.mulf %250, %252 : vector<8x32xf32>
    %256 = arith.addf %254, %255 : vector<8x32xf32>
    %257 = math.tanh %256 : vector<8x32xf32>
    %258 = arith.mulf %253, %257 : vector<8x32xf32>
    %c6_i32 = arith.constant 6 : i32
    %c8_i32_54 = arith.constant 8 : i32
    %259 = arith.muli %c6_i32, %c8_i32_54 : i32
    %260 = tpu.assume_multiple %259, 8 : i32
    %261 = arith.index_cast %260 : i32 to index
    %c0_55 = arith.constant 0 : index
    %262 = vector.load %arg8[%261, %c0_55] : memref<64x128xf32, #tpu.memory_space<vmem>>, vector<8x128xf32>
    %263 = arith.addf %262, %241 : vector<8x128xf32>
    %264 = math.tanh %263 : vector<8x128xf32>
    %cst_56 = arith.constant 5.000000e-01 : f32
    %265 = vector.broadcast %cst_56 : f32 to vector<8x128xf32>
    %266 = arith.mulf %265, %264 : vector<8x128xf32>
    %cst_57 = arith.constant 5.000000e-01 : f32
    %267 = vector.broadcast %cst_57 : f32 to vector<8x128xf32>
    %268 = arith.addf %266, %267 : vector<8x128xf32>
    %269 = arith.select %16, %264, %268 : vector<8x128xi1>, vector<8x128xf32>
    %270 = vector.extract_strided_slice %269 {offsets = [0, 0], sizes = [8, 32], strides = [1, 1]} : vector<8x128xf32> to vector<8x32xf32>
    %271 = vector.extract_strided_slice %269 {offsets = [0, 32], sizes = [8, 32], strides = [1, 1]} : vector<8x128xf32> to vector<8x32xf32>
    %272 = vector.extract_strided_slice %269 {offsets = [0, 64], sizes = [8, 32], strides = [1, 1]} : vector<8x128xf32> to vector<8x32xf32>
    %273 = vector.extract_strided_slice %269 {offsets = [0, 96], sizes = [8, 32], strides = [1, 1]} : vector<8x128xf32> to vector<8x32xf32>
    %274 = arith.mulf %271, %236 : vector<8x32xf32>
    %275 = arith.mulf %270, %272 : vector<8x32xf32>
    %276 = arith.addf %274, %275 : vector<8x32xf32>
    %277 = math.tanh %276 : vector<8x32xf32>
    %278 = arith.mulf %273, %277 : vector<8x32xf32>
    %279 = tpu.concatenate %278, %258 in 1 : vector<8x32xf32>, vector<8x32xf32> -> vector<8x64xf32>
    %cst_58 = arith.constant dense<0.000000e+00> : vector<8x256xf32>
    %280 = tpu.matmul %279, %7, %cst_58 {dimension_numbers = #tpu.dot_dimension_numbers<[1], [0], [0], [1], [0, 0, 1, 1], [], []>} : vector<8x64xf32>, vector<64x256xf32>, vector<8x256xf32> -> vector<8x256xf32>
    %281 = vector.extract_strided_slice %280 {offsets = [0, 0], sizes = [8, 128], strides = [1, 1]} : vector<8x256xf32> to vector<8x128xf32>
    %282 = vector.extract_strided_slice %280 {offsets = [0, 128], sizes = [8, 128], strides = [1, 1]} : vector<8x256xf32> to vector<8x128xf32>
    %283 = arith.addf %282, %10 : vector<8x128xf32>
    %284 = math.tanh %283 : vector<8x128xf32>
    %cst_59 = arith.constant 5.000000e-01 : f32
    %285 = vector.broadcast %cst_59 : f32 to vector<8x128xf32>
    %286 = arith.mulf %285, %284 : vector<8x128xf32>
    %cst_60 = arith.constant 5.000000e-01 : f32
    %287 = vector.broadcast %cst_60 : f32 to vector<8x128xf32>
    %288 = arith.addf %286, %287 : vector<8x128xf32>
    %289 = arith.select %16, %284, %288 : vector<8x128xi1>, vector<8x128xf32>
    %290 = vector.extract_strided_slice %289 {offsets = [0, 0], sizes = [8, 32], strides = [1, 1]} : vector<8x128xf32> to vector<8x32xf32>
    %291 = vector.extract_strided_slice %289 {offsets = [0, 32], sizes = [8, 32], strides = [1, 1]} : vector<8x128xf32> to vector<8x32xf32>
    %292 = vector.extract_strided_slice %289 {offsets = [0, 64], sizes = [8, 32], strides = [1, 1]} : vector<8x128xf32> to vector<8x32xf32>
    %293 = vector.extract_strided_slice %289 {offsets = [0, 96], sizes = [8, 32], strides = [1, 1]} : vector<8x128xf32> to vector<8x32xf32>
    %294 = arith.mulf %291, %256 : vector<8x32xf32>
    %295 = arith.mulf %290, %292 : vector<8x32xf32>
    %296 = arith.addf %294, %295 : vector<8x32xf32>
    %297 = math.tanh %296 : vector<8x32xf32>
    %298 = arith.mulf %293, %297 : vector<8x32xf32>
    %c7_i32 = arith.constant 7 : i32
    %c8_i32_61 = arith.constant 8 : i32
    %299 = arith.muli %c7_i32, %c8_i32_61 : i32
    %300 = tpu.assume_multiple %299, 8 : i32
    %301 = arith.index_cast %300 : i32 to index
    %c0_62 = arith.constant 0 : index
    %302 = vector.load %arg8[%301, %c0_62] : memref<64x128xf32, #tpu.memory_space<vmem>>, vector<8x128xf32>
    %303 = arith.addf %302, %281 : vector<8x128xf32>
    %304 = math.tanh %303 : vector<8x128xf32>
    %cst_63 = arith.constant 5.000000e-01 : f32
    %305 = vector.broadcast %cst_63 : f32 to vector<8x128xf32>
    %306 = arith.mulf %305, %304 : vector<8x128xf32>
    %cst_64 = arith.constant 5.000000e-01 : f32
    %307 = vector.broadcast %cst_64 : f32 to vector<8x128xf32>
    %308 = arith.addf %306, %307 : vector<8x128xf32>
    %309 = arith.select %16, %304, %308 : vector<8x128xi1>, vector<8x128xf32>
    %310 = vector.extract_strided_slice %309 {offsets = [0, 0], sizes = [8, 32], strides = [1, 1]} : vector<8x128xf32> to vector<8x32xf32>
    %311 = vector.extract_strided_slice %309 {offsets = [0, 32], sizes = [8, 32], strides = [1, 1]} : vector<8x128xf32> to vector<8x32xf32>
    %312 = vector.extract_strided_slice %309 {offsets = [0, 64], sizes = [8, 32], strides = [1, 1]} : vector<8x128xf32> to vector<8x32xf32>
    %313 = vector.extract_strided_slice %309 {offsets = [0, 96], sizes = [8, 32], strides = [1, 1]} : vector<8x128xf32> to vector<8x32xf32>
    %314 = arith.mulf %311, %276 : vector<8x32xf32>
    %315 = arith.mulf %310, %312 : vector<8x32xf32>
    %316 = arith.addf %314, %315 : vector<8x32xf32>
    %317 = math.tanh %316 : vector<8x32xf32>
    %318 = arith.mulf %313, %317 : vector<8x32xf32>
    %319 = tpu.concatenate %318, %298 in 1 : vector<8x32xf32>, vector<8x32xf32> -> vector<8x64xf32>
    %cst_65 = arith.constant dense<0.000000e+00> : vector<8x256xf32>
    %320 = tpu.matmul %319, %7, %cst_65 {dimension_numbers = #tpu.dot_dimension_numbers<[1], [0], [0], [1], [0, 0, 1, 1], [], []>} : vector<8x64xf32>, vector<64x256xf32>, vector<8x256xf32> -> vector<8x256xf32>
    %321 = vector.extract_strided_slice %320 {offsets = [0, 0], sizes = [8, 128], strides = [1, 1]} : vector<8x256xf32> to vector<8x128xf32>
    %322 = vector.extract_strided_slice %320 {offsets = [0, 128], sizes = [8, 128], strides = [1, 1]} : vector<8x256xf32> to vector<8x128xf32>
    %323 = arith.addf %322, %10 : vector<8x128xf32>
    %324 = math.tanh %323 : vector<8x128xf32>
    %cst_66 = arith.constant 5.000000e-01 : f32
    %325 = vector.broadcast %cst_66 : f32 to vector<8x128xf32>
    %326 = arith.mulf %325, %324 : vector<8x128xf32>
    %cst_67 = arith.constant 5.000000e-01 : f32
    %327 = vector.broadcast %cst_67 : f32 to vector<8x128xf32>
    %328 = arith.addf %326, %327 : vector<8x128xf32>
    %329 = arith.select %16, %324, %328 : vector<8x128xi1>, vector<8x128xf32>
    %330 = vector.extract_strided_slice %329 {offsets = [0, 0], sizes = [8, 32], strides = [1, 1]} : vector<8x128xf32> to vector<8x32xf32>
    %331 = vector.extract_strided_slice %329 {offsets = [0, 32], sizes = [8, 32], strides = [1, 1]} : vector<8x128xf32> to vector<8x32xf32>
    %332 = vector.extract_strided_slice %329 {offsets = [0, 64], sizes = [8, 32], strides = [1, 1]} : vector<8x128xf32> to vector<8x32xf32>
    %333 = vector.extract_strided_slice %329 {offsets = [0, 96], sizes = [8, 32], strides = [1, 1]} : vector<8x128xf32> to vector<8x32xf32>
    %334 = arith.mulf %331, %296 : vector<8x32xf32>
    %335 = arith.mulf %330, %332 : vector<8x32xf32>
    %336 = arith.addf %334, %335 : vector<8x32xf32>
    %337 = math.tanh %336 : vector<8x32xf32>
    %338 = arith.mulf %333, %337 : vector<8x32xf32>
    %c8_i32_68 = arith.constant 8 : i32
    %c0_69 = arith.constant 0 : index
    %c0_70 = arith.constant 0 : index
    %339 = vector.load %arg5[%c0_69, %c0_70] : memref<32x128xf32, #tpu.memory_space<vmem>>, vector<32x128xf32>
    %cst_71 = arith.constant dense<0.000000e+00> : vector<8x128xf32>
    %340 = tpu.matmul %338, %339, %cst_71 {dimension_numbers = #tpu.dot_dimension_numbers<[1], [0], [0], [1], [0, 0, 1, 1], [], []>} : vector<8x32xf32>, vector<32x128xf32>, vector<8x128xf32> -> vector<8x128xf32>
    %c0_72 = arith.constant 0 : index
    %c0_73 = arith.constant 0 : index
    %341 = vector.load %arg6[%c0_72, %c0_73] : memref<1x128xf32, #tpu.memory_space<vmem>>, vector<1x128xf32>
    %342 = vector.broadcast %341 : vector<1x128xf32> to vector<8x128xf32>
    %343 = arith.addf %340, %342 : vector<8x128xf32>
    %cst_74 = arith.constant dense<0xFF800000> : vector<8xf32>
    %344 = vector.multi_reduction <maximumf>, %343, %cst_74 [1] : vector<8x128xf32> to vector<8xf32>
    %345 = vector.shape_cast %344 : vector<8xf32> to vector<8x1xf32>
    %346 = vector.broadcast %345 : vector<8x1xf32> to vector<8x128xf32>
    %347 = arith.subf %343, %346 : vector<8x128xf32>
    %348 = math.exp %347 : vector<8x128xf32>
    %cst_75 = arith.constant dense<0.000000e+00> : vector<8xf32>
    %349 = vector.multi_reduction <add>, %348, %cst_75 [1] : vector<8x128xf32> to vector<8xf32>
    %350 = vector.shape_cast %349 : vector<8xf32> to vector<8x1xf32>
    %351 = vector.broadcast %350 : vector<8x1xf32> to vector<8x128xf32>
    %352 = arith.divf %348, %351 : vector<8x128xf32>
    %c0_76 = arith.constant 0 : index
    %c0_77 = arith.constant 0 : index
    %353 = vector.load %arg7[%c0_76, %c0_77] : memref<8x128xf32, #tpu.memory_space<vmem>>, vector<8x128xf32>
    tpu.vector_store %arg7[%c0_76, %c0_77], %352 {strides = array<i32>} : memref<8x128xf32, #tpu.memory_space<vmem>>, vector<8x128xf32>,
    return
  }
}

</mosaic_0001>

<llo_original>
// kernel: tpu_custom_call.1
$region0: #{tpu_custom_call.1}
  #allocation0 [shape = 'u32[]', space=smem, size = 0x4, offset = 0x4, fixed_abs, tag = 'smem constant byte address 0x4 - core index']
  #allocation1 [shape = 'u32[144,128]{1,0:T(1,128)}', space=vmem, size = 0x12000, scoped, tag = 'internal scratch']
  #allocation2 [shape = 'f32[64,128]{1,0:T(8,128)}', space=vmem, size = 0x8000, scoped, tag = 'scratch operand']
  %s0 = inlined_call_operand.vmem [shape: f32[64,16], index: 0, kind: input, shape index: {}]
  %s1 = inlined_call_operand.vmem [shape: f32[16,128], index: 1, kind: input, shape index: {}]
  %s2 = inlined_call_operand.vmem [shape: f32[1,128], index: 2, kind: input, shape index: {}]
  %s3 = inlined_call_operand.hbm [shape: f32[64,256], index: 3, kind: input, shape index: {}]
  %s4 = inlined_call_operand.vmem [shape: f32[1,128], index: 4, kind: input, shape index: {}]
  %s5 = inlined_call_operand.vmem [shape: f32[32,128], index: 5, kind: input, shape index: {}]
  %s6 = inlined_call_operand.vmem [shape: f32[1,128], index: 6, kind: input, shape index: {}]
  %s7 = inlined_call_operand.hbm [shape: f32[8,128], index: 7, kind: output, shape index: {}]
  %s8 = sld [smem:[#allocation0]]
  $region42: #{tpu_custom_call.1} parent=0
    _
  %s10 = ssub.s32 1, %s8
  %s11 = scalar_select 0, %s10, %s8
  $region1: #{tpu_custom_call.1} parent=0
    #allocation3 [shape = 'u8[65536]{0}', space=vmem, size = 0x10000, scoped, tag = 'input window, operand 3, single buffered']
    #allocation4 [shape = 's32[1]{0}', space=sflag, size = 0x4, scoped, tag = 'scoped memory for tpu_custom_call.1']
    #allocation5 [shape = 's32[1]{0}', space=sflag, size = 0x4, scoped, tag = 'scoped memory for tpu_custom_call.1']
    #allocation6 [shape = 'u8[4096]{0}', space=vmem, size = 0x1000, scoped, tag = 'output window, operand 0, single buffered']
    %12 = vsyncpa [#allocation4], 0
    %13 = vsyncpa [#allocation5], 0
    // Predicated region
    $region2: #{tpu_custom_call.1} parent=1 // pred_check
      _
    $region3: #{tpu_custom_call.1} parent=1 // pred_check_branch
      %15 = sbr.rel (0) target = $region5
    $region4: #{tpu_custom_call.1} parent=1 // pred_region
      _
    $region5: #{tpu_custom_call.1} parent=1 // pred_fallthru
      _
    // Predicated region
    $region6: #{tpu_custom_call.1} parent=1 // pred_check
      _
    $region7: #{tpu_custom_call.1} parent=1 // pred_check_branch
      %17 = sbr.rel (0) target = $region9
    $region8: #{tpu_custom_call.1} parent=1 // pred_region
      _
    $region9: #{tpu_custom_call.1} parent=1 // pred_fallthru
      _
    // Predicated region
    $region10: #{tpu_custom_call.1} parent=1 // pred_check
      _
    $region11: #{tpu_custom_call.1} parent=1 // pred_check_branch
      %19 = sbr.rel (0) target = $region13
    $region12: #{tpu_custom_call.1} parent=1 // pred_region
      _
    $region13: #{tpu_custom_call.1} parent=1 // pred_fallthru
      _
    // Predicated region
    $region14: #{tpu_custom_call.1} parent=1 // pred_check
      _
    $region15: #{tpu_custom_call.1} parent=1 // pred_check_branch
      %21 = sbr.rel (0) target = $region17
    $region16: #{tpu_custom_call.1} parent=1 // pred_region
      %s23 = ssub.s32 2048, 2048
      %24 = vsyncadd [#allocation4], %s23
      %s25 = sshll.u32 [#allocation3], 4
      %s26 = int_to_ptr.vmem [resolvable:$true] %s25
      %31 = dma.hbm_to_vmem [thread:$0]  %s3, 2048, %s26, [#allocation4], 256, 256, 16
    $region17: #{tpu_custom_call.1} parent=1 // pred_fallthru
      _
    // Predicated region
    $region18: #{tpu_custom_call.1} parent=1 // pred_check
      _
    $region19: #{tpu_custom_call.1} parent=1 // pred_check_branch
      %33 = sbr.rel (0) target = $region21
    $region20: #{tpu_custom_call.1} parent=1 // pred_region
      _
    $region21: #{tpu_custom_call.1} parent=1 // pred_fallthru
      _
    // Predicated region
    $region22: #{tpu_custom_call.1} parent=1 // pred_check
      _
    $region23: #{tpu_custom_call.1} parent=1 // pred_check_branch
      %35 = sbr.rel (0) target = $region25
    $region24: #{tpu_custom_call.1} parent=1 // pred_region
      _
    $region25: #{tpu_custom_call.1} parent=1 // pred_fallthru
      _
    // Predicated region
    $region26: #{tpu_custom_call.1} parent=1 // pred_check
      _
    $region27: #{tpu_custom_call.1} parent=1 // pred_check_branch
      %37 = sbr.rel (0) target = $region29
    $region28: #{tpu_custom_call.1} parent=1 // pred_region
      _
    $region29: #{tpu_custom_call.1} parent=1 // pred_fallthru
      _
    // Predicated region
    $region30: #{tpu_custom_call.1} parent=1 // pred_check
      _
    $region31: #{tpu_custom_call.1} parent=1 // pred_check_branch
      %39 = sbr.rel (0) target = $region33
    $region32: #{tpu_custom_call.1} parent=1 // pred_region
      %40 = dma.done [#allocation4], 2048
    $region33: #{tpu_custom_call.1} parent=1 // pred_fallthru
      _
    %v41 = vld [vmem:[%s0] sm:$0xff]
    %v42 = vld [vmem:[%s0 + $0x8] sm:$0xff]
    %v43 = vld [vmem:[%s0 + $0x10] sm:$0xff]
    %v44 = vld [vmem:[%s0 + $0x18] sm:$0xff]
    %v45 = vld [vmem:[%s0 + $0x20] sm:$0xff]
    %v46 = vld [vmem:[%s0 + $0x28] sm:$0xff]
    %v47 = vld [vmem:[%s0 + $0x30] sm:$0xff]
    %v48 = vld [vmem:[%s0 + $0x38] sm:$0xff]
    %v49 = vld [vmem:[%s1] sm:$0xff]
    %v50 = vld [vmem:[%s1 + $0x8] sm:$0xff]
    %v51 = vld [vmem:[%s2] sm:$0x1]
    %v53 = vlaneseq
    %v54 = vshrl.u32 %v53, 7
    %v55 = vsub.s32 0, %v54
    %v56 = vrot.slane %v51, %v55
    %vm58 = vcmask 130048
    %v60 = vsel %vm58, %v41, 0
    %v63 = vsel %vm58, %v42, 0
    %v66 = vsel %vm58, %v43, 0
    %v69 = vsel %vm58, %v44, 0
    %v72 = vsel %vm58, %v45, 0
    %v75 = vsel %vm58, %v46, 0
    %v78 = vsel %vm58, %v47, 0
    %v81 = vsel %vm58, %v48, 0
    %83 = vmatprep.subr.mxu0 0.0
    %84 = vmatpush1.msra.mxu0 0.0
    %85 = vmatprep.subr.mxu0 0.0
    %86 = vmatpush1.msra.mxu0 0.0
    %87 = vmatprep.subr.mxu0 0.0
    %88 = vmatpush1.msra.mxu0 0.0
    %89 = vmatprep.subr.mxu0 0.0
    %90 = vmatpush1.msra.mxu0 0.0
    %91 = vmatprep.subr.mxu0 0.0
    %92 = vmatpush1.msra.mxu0 0.0
    %93 = vmatprep.subr.mxu0 0.0
    %94 = vmatpush1.msra.mxu0 0.0
    %95 = vmatprep.subr.mxu0 0.0
    %96 = vmatpush1.msra.mxu0 0.0
    %97 = vmatprep.subr.mxu0 0.0
    %98 = vmatpush1.msra.mxu0 0.0
    %99 = vmatprep.subr.mxu0 0.0
    %100 = vmatpush1.msra.mxu0 0.0
    %101 = vmatprep.subr.mxu0 0.0
    %102 = vmatpush1.msra.mxu0 0.0
    %103 = vmatprep.subr.mxu0 0.0
    %104 = vmatpush1.msra.mxu0 0.0
    %105 = vmatprep.subr.mxu0 0.0
    %106 = vmatpush1.msra.mxu0 0.0
    %107 = vmatprep.subr.mxu0 0.0
    %108 = vmatpush1.msra.mxu0 0.0
    %109 = vmatprep.subr.mxu0 0.0
    %110 = vmatpush1.msra.mxu0 0.0
    %111 = vmatprep.subr.mxu0 0.0
    %112 = vmatpush1.msra.mxu0 %v50
    %113 = vmatprep.subr.mxu0 0.0
    %114 = vmatpush1.msra.mxu0 %v49
    %115 = vmatprep.subr.mxu0 0.0
    %116 = vmatpush2.msra.mxu0 0.0
    %117 = vmatprep.subr.mxu0 0.0
    %118 = vmatpush2.msra.mxu0 0.0
    %119 = vmatprep.subr.mxu0 0.0
    %120 = vmatpush2.msra.mxu0 0.0
    %121 = vmatprep.subr.mxu0 0.0
    %122 = vmatpush2.msra.mxu0 0.0
    %123 = vmatprep.subr.mxu0 0.0
    %124 = vmatpush2.msra.mxu0 0.0
    %125 = vmatprep.subr.mxu0 0.0
    %126 = vmatpush2.msra.mxu0 0.0
    %127 = vmatprep.subr.mxu0 0.0
    %128 = vmatpush2.msra.mxu0 0.0
    %129 = vmatprep.subr.mxu0 0.0
    %130 = vmatpush2.msra.mxu0 0.0
    %131 = vmatprep.subr.mxu0 0.0
    %132 = vmatpush2.msra.mxu0 0.0
    %133 = vmatprep.subr.mxu0 0.0
    %134 = vmatpush2.msra.mxu0 0.0
    %135 = vmatprep.subr.mxu0 0.0
    %136 = vmatpush2.msra.mxu0 0.0
    %137 = vmatprep.subr.mxu0 0.0
    %138 = vmatpush2.msra.mxu0 0.0
    %139 = vmatprep.subr.mxu0 0.0
    %140 = vmatpush2.msra.mxu0 0.0
    %141 = vmatprep.subr.mxu0 0.0
    %142 = vmatpush2.msra.mxu0 0.0
    %143 = vmatprep.subr.mxu0 0.0
    %144 = vmatpush2.msra.mxu0 0.0
    %145 = vmatprep.subr.mxu0 0.0
    %146 = vmatpush2.msra.mxu0 0.0
    %147 = vmatprep.mubr.f32.mxu0 0.0
    %148 = vmatmul.mubr.f32.gmra.mxu0 %v60
    %v149 = vpop.f32.mrf.mxu0
    %v150 = vadd.f32 %v56, %v149
    %v151 = vpop.f32.mrf.mxu0
    %152 = vmatprep.mubr.f32.mxu0 0.0
    %153 = vmatmul.mubr.f32.gmra.mxu0 %v63
    %v154 = vpop.f32.mrf.mxu0
    %v155 = vadd.f32 %v56, %v154
    %v156 = vpop.f32.mrf.mxu0
    %157 = vmatprep.mubr.f32.mxu0 0.0
    %158 = vmatmul.mubr.f32.gmra.mxu0 %v66
    %v159 = vpop.f32.mrf.mxu0
    %v160 = vadd.f32 %v56, %v159
    %v161 = vpop.f32.mrf.mxu0
    %162 = vmatprep.mubr.f32.mxu0 0.0
    %163 = vmatmul.mubr.f32.gmra.mxu0 %v69
    %v164 = vpop.f32.mrf.mxu0
    %v165 = vadd.f32 %v56, %v164
    %v166 = vpop.f32.mrf.mxu0
    %167 = vmatprep.mubr.f32.mxu0 0.0
    %168 = vmatmul.mubr.f32.gmra.mxu0 %v72
    %v169 = vpop.f32.mrf.mxu0
    %v170 = vadd.f32 %v56, %v169
    %v171 = vpop.f32.mrf.mxu0
    %172 = vmatprep.mubr.f32.mxu0 0.0
    %173 = vmatmul.mubr.f32.gmra.mxu0 %v75
    %v174 = vpop.f32.mrf.mxu0
    %v175 = vadd.f32 %v56, %v174
    %v176 = vpop.f32.mrf.mxu0
    %177 = vmatprep.mubr.f32.mxu0 0.0
    %178 = vmatmul.mubr.f32.gmra.mxu0 %v78
    %v179 = vpop.f32.mrf.mxu0
    %v180 = vadd.f32 %v56, %v179
    %v181 = vpop.f32.mrf.mxu0
    %182 = vmatprep.mubr.f32.mxu0 0.0
    %183 = vmatmul.mubr.f32.gmra.mxu0 %v81
    %v184 = vpop.f32.mrf.mxu0
    %v185 = vadd.f32 %v56, %v184
    %v186 = vpop.f32.mrf.mxu0
    %187 = vdwg.mxu0
    %188 = vst [vmem:[#allocation2] sm:$0xff] %v150
    %189 = vst [vmem:[#allocation2 + $0x8] sm:$0xff] %v155
    %190 = vst [vmem:[#allocation2 + $0x10] sm:$0xff] %v160
    %191 = vst [vmem:[#allocation2 + $0x18] sm:$0xff] %v165
    %192 = vst [vmem:[#allocation2 + $0x20] sm:$0xff] %v170
    %193 = vst [vmem:[#allocation2 + $0x28] sm:$0xff] %v175
    %194 = vst [vmem:[#allocation2 + $0x30] sm:$0xff] %v180
    %195 = vst [vmem:[#allocation2 + $0x38] sm:$0xff] %v185
    %v196 = vld [vmem:[#allocation3] sm:$0xff]
    %v197 = vld [vmem:[#allocation3 + $0x8] sm:$0xff]
    %v198 = vld [vmem:[#allocation3 + $0x10] sm:$0xff]
    %v199 = vld [vmem:[#allocation3 + $0x18] sm:$0xff]
    %v200 = vld [vmem:[#allocation3 + $0x20] sm:$0xff]
    %v201 = vld [vmem:[#allocation3 + $0x28] sm:$0xff]
    %v202 = vld [vmem:[#allocation3 + $0x30] sm:$0xff]
    %v203 = vld [vmem:[#allocation3 + $0x38] sm:$0xff]
    %v204 = vld [vmem:[#allocation3 + $0x40] sm:$0xff]
    %v205 = vld [vmem:[#allocation3 + $0x48] sm:$0xff]
    %v206 = vld [vmem:[#allocation3 + $0x50] sm:$0xff]
    %v207 = vld [vmem:[#allocation3 + $0x58] sm:$0xff]
    %v208 = vld [vmem:[#allocation3 + $0x60] sm:$0xff]
    %v209 = vld [vmem:[#allocation3 + $0x68] sm:$0xff]
    %v210 = vld [vmem:[#allocation3 + $0x70] sm:$0xff]
    %v211 = vld [vmem:[#allocation3 + $0x78] sm:$0xff]
    %v212 = vld [vmem:[%s4] sm:$0x1]
    %v214 = vlaneseq
    %v215 = vshrl.u32 %v214, 7
    %v216 = vsub.s32 0, %v215
    %v217 = vrot.slane %v212, %v216
    %v219 = vlaneseq
    %v220 = vand.u32 %v219, 127
    %vm221 = vcmp.ge.s32.totalorder %v220, 64
    %vm222 = vcmp.lt.s32.totalorder %v220, 96
    %vm223 = vmand %vm221, %vm222
    %v224 = vld [vmem:[#allocation2] sm:$0xff]
    %v225 = vadd.f32 %v224, 0.0
    %v226 = vtanh.pop %v225
    %v227 = vmul.f32 %v226, 0.5
    %v228 = vadd.f32 %v227, 0.5
    %v229 = vsel %vm223, %v226, %v228
    %v230 = vmul.f32 %v229, 0.0
    %232 = vrot.lane.b32.xlu0 %v229, 64
    %v233 = vpop.permute.xlu0 %232
    %v235 = vmul.f32 %v229, %v233
    %237 = vrot.lane.b32.xlu0 %v235, 32
    %v238 = vpop.permute.xlu0 %237
    %v240 = vadd.f32 %v230, %v238
    %v241 = vtanh.pop %v240
    %243 = vrot.lane.b32.xlu0 %v241, 64
    %v244 = vpop.permute.xlu0 %243
    %v246 = vmul.f32 %v229, %v244
    %248 = vrot.lane.b32.xlu0 %v246, 32
    %v249 = vpop.permute.xlu0 %248
    %vm251 = vcmask 261120
    %v252 = vsel %vm251, %v249, 0.0
    %vm253 = vcmask 523264
    %v255 = vsel %vm253, %v252, 0
    %257 = vmatprep.subr.mxu0 0.0
    %258 = vmatpush1.msra.mxu0 0.0
    %259 = vmatprep.subr.mxu0 0.0
    %260 = vmatpush1.msra.mxu0 0.0
    %261 = vmatprep.subr.mxu0 0.0
    %262 = vmatpush1.msra.mxu0 0.0
    %263 = vmatprep.subr.mxu0 0.0
    %264 = vmatpush1.msra.mxu0 0.0
    %265 = vmatprep.subr.mxu0 0.0
    %266 = vmatpush1.msra.mxu0 0.0
    %267 = vmatprep.subr.mxu0 0.0
    %268 = vmatpush1.msra.mxu0 0.0
    %269 = vmatprep.subr.mxu0 0.0
    %270 = vmatpush1.msra.mxu0 0.0
    %271 = vmatprep.subr.mxu0 0.0
    %272 = vmatpush1.msra.mxu0 0.0
    %273 = vmatprep.subr.mxu0 %v211
    %274 = vmatpush1.msra.mxu0 %v210
    %275 = vmatprep.subr.mxu0 %v209
    %276 = vmatpush1.msra.mxu0 %v208
    %277 = vmatprep.subr.mxu0 %v207
    %278 = vmatpush1.msra.mxu0 %v206
    %279 = vmatprep.subr.mxu0 %v205
    %280 = vmatpush1.msra.mxu0 %v204
    %281 = vmatprep.subr.mxu0 %v203
    %282 = vmatpush1.msra.mxu0 %v202
    %283 = vmatprep.subr.mxu0 %v201
    %284 = vmatpush1.msra.mxu0 %v200
    %285 = vmatprep.subr.mxu0 %v199
    %286 = vmatpush1.msra.mxu0 %v198
    %287 = vmatprep.subr.mxu0 %v197
    %288 = vmatpush1.msra.mxu0 %v196
    %289 = vmatprep.subr.mxu0 0.0
    %290 = vmatpush2.msra.mxu0 0.0
    %291 = vmatprep.subr.mxu0 0.0
    %292 = vmatpush2.msra.mxu0 0.0
    %293 = vmatprep.subr.mxu0 0.0
    %294 = vmatpush2.msra.mxu0 0.0
    %295 = vmatprep.subr.mxu0 0.0
    %296 = vmatpush2.msra.mxu0 0.0
    %297 = vmatprep.subr.mxu0 0.0
    %298 = vmatpush2.msra.mxu0 0.0
    %299 = vmatprep.subr.mxu0 0.0
    %300 = vmatpush2.msra.mxu0 0.0
    %301 = vmatprep.subr.mxu0 0.0
    %302 = vmatpush2.msra.mxu0 0.0
    %303 = vmatprep.subr.mxu0 0.0
    %304 = vmatpush2.msra.mxu0 0.0
    %305 = vmatprep.subr.mxu0 0.0
    %306 = vmatpush2.msra.mxu0 0.0
    %307 = vmatprep.subr.mxu0 0.0
    %308 = vmatpush2.msra.mxu0 0.0
    %309 = vmatprep.subr.mxu0 0.0
    %310 = vmatpush2.msra.mxu0 0.0
    %311 = vmatprep.subr.mxu0 0.0
    %312 = vmatpush2.msra.mxu0 0.0
    %313 = vmatprep.subr.mxu0 0.0
    %314 = vmatpush2.msra.mxu0 0.0
    %315 = vmatprep.subr.mxu0 0.0
    %316 = vmatpush2.msra.mxu0 0.0
    %317 = vmatprep.subr.mxu0 0.0
    %318 = vmatpush2.msra.mxu0 0.0
    %319 = vmatprep.subr.mxu0 0.0
    %320 = vmatpush2.msra.mxu0 0.0
    %321 = vmatprep.mubr.f32.mxu0 0.0
    %322 = vmatmul.mubr.f32.gmra.mxu0 %v255
    %v323 = vpop.f32.mrf.mxu0
    %v324 = vadd.f32 0.0, %v323
    %v325 = vpop.f32.mrf.mxu0
    %v326 = vadd.f32 0.0, %v325
    %327 = vdwg.mxu0
    %v328 = vadd.f32 %v326, %v217
    %v329 = vtanh.pop %v328
    %v330 = vmul.f32 %v329, 0.5
    %v331 = vadd.f32 %v330, 0.5
    %v332 = vsel %vm223, %v329, %v331
    %v333 = vmul.f32 %v332, 0.0
    %335 = vrot.lane.b32.xlu0 %v332, 64
    %v336 = vpop.permute.xlu0 %335
    %v338 = vmul.f32 %v332, %v336
    %340 = vrot.lane.b32.xlu0 %v338, 32
    %v341 = vpop.permute.xlu0 %340
    %v343 = vadd.f32 %v333, %v341
    %v344 = vtanh.pop %v343
    %346 = vrot.lane.b32.xlu0 %v344, 64
    %v347 = vpop.permute.xlu0 %346
    %v349 = vmul.f32 %v332, %v347
    %s350 = scalar_lea.vmem [#allocation2], 8
    %v351 = vld [vmem:[%s350] sm:$0xff]
    %v352 = vadd.f32 %v351, %v324
    %v353 = vtanh.pop %v352
    %v354 = vmul.f32 %v353, 0.5
    %v355 = vadd.f32 %v354, 0.5
    %v356 = vsel %vm223, %v353, %v355
    %v357 = vmul.f32 %v356, %v240
    %359 = vrot.lane.b32.xlu0 %v356, 64
    %v360 = vpop.permute.xlu0 %359
    %v362 = vmul.f32 %v356, %v360
    %364 = vrot.lane.b32.xlu0 %v362, 32
    %v365 = vpop.permute.xlu0 %364
    %v367 = vadd.f32 %v357, %v365
    %v368 = vtanh.pop %v367
    %370 = vrot.lane.b32.xlu0 %v368, 64
    %v371 = vpop.permute.xlu0 %370
    %v373 = vmul.f32 %v356, %v371
    %375 = vrot.lane.b32.xlu0 %v373, 32
    %v376 = vpop.permute.xlu0 %375
    %379 = vrot.lane.b32.xlu0 %v349, 64
    %v380 = vpop.permute.xlu0 %379
    %v382 = vsel %vm251, %v376, %v380
    %v384 = vsel %vm253, %v382, 0
    %386 = vmatprep.subr.mxu0 0.0
    %387 = vmatpush1.msra.mxu0 0.0
    %388 = vmatprep.subr.mxu0 0.0
    %389 = vmatpush1.msra.mxu0 0.0
    %390 = vmatprep.subr.mxu0 0.0
    %391 = vmatpush1.msra.mxu0 0.0
    %392 = vmatprep.subr.mxu0 0.0
    %393 = vmatpush1.msra.mxu0 0.0
    %394 = vmatprep.subr.mxu0 0.0
    %395 = vmatpush1.msra.mxu0 0.0
    %396 = vmatprep.subr.mxu0 0.0
    %397 = vmatpush1.msra.mxu0 0.0
    %398 = vmatprep.subr.mxu0 0.0
    %399 = vmatpush1.msra.mxu0 0.0
    %400 = vmatprep.subr.mxu0 0.0
    %401 = vmatpush1.msra.mxu0 0.0
    %402 = vmatprep.subr.mxu0 %v211
    %403 = vmatpush1.msra.mxu0 %v210
    %404 = vmatprep.subr.mxu0 %v209
    %405 = vmatpush1.msra.mxu0 %v208
    %406 = vmatprep.subr.mxu0 %v207
    %407 = vmatpush1.msra.mxu0 %v206
    %408 = vmatprep.subr.mxu0 %v205
    %409 = vmatpush1.msra.mxu0 %v204
    %410 = vmatprep.subr.mxu0 %v203
    %411 = vmatpush1.msra.mxu0 %v202
    %412 = vmatprep.subr.mxu0 %v201
    %413 = vmatpush1.msra.mxu0 %v200
    %414 = vmatprep.subr.mxu0 %v199
    %415 = vmatpush1.msra.mxu0 %v198
    %416 = vmatprep.subr.mxu0 %v197
    %417 = vmatpush1.msra.mxu0 %v196
    %418 = vmatprep.subr.mxu0 0.0
    %419 = vmatpush2.msra.mxu0 0.0
    %420 = vmatprep.subr.mxu0 0.0
    %421 = vmatpush2.msra.mxu0 0.0
    %422 = vmatprep.subr.mxu0 0.0
    %423 = vmatpush2.msra.mxu0 0.0
    %424 = vmatprep.subr.mxu0 0.0
    %425 = vmatpush2.msra.mxu0 0.0
    %426 = vmatprep.subr.mxu0 0.0
    %427 = vmatpush2.msra.mxu0 0.0
    %428 = vmatprep.subr.mxu0 0.0
    %429 = vmatpush2.msra.mxu0 0.0
    %430 = vmatprep.subr.mxu0 0.0
    %431 = vmatpush2.msra.mxu0 0.0
    %432 = vmatprep.subr.mxu0 0.0
    %433 = vmatpush2.msra.mxu0 0.0
    %434 = vmatprep.subr.mxu0 0.0
    %435 = vmatpush2.msra.mxu0 0.0
    %436 = vmatprep.subr.mxu0 0.0
    %437 = vmatpush2.msra.mxu0 0.0
    %438 = vmatprep.subr.mxu0 0.0
    %439 = vmatpush2.msra.mxu0 0.0
    %440 = vmatprep.subr.mxu0 0.0
    %441 = vmatpush2.msra.mxu0 0.0
    %442 = vmatprep.subr.mxu0 0.0
    %443 = vmatpush2.msra.mxu0 0.0
    %444 = vmatprep.subr.mxu0 0.0
    %445 = vmatpush2.msra.mxu0 0.0
    %446 = vmatprep.subr.mxu0 0.0
    %447 = vmatpush2.msra.mxu0 0.0
    %448 = vmatprep.subr.mxu0 0.0
    %449 = vmatpush2.msra.mxu0 0.0
    %450 = vmatprep.mubr.f32.mxu0 0.0
    %451 = vmatmul.mubr.f32.gmra.mxu0 %v384
    %v452 = vpop.f32.mrf.mxu0
    %v453 = vadd.f32 0.0, %v452
    %v454 = vpop.f32.mrf.mxu0
    %v455 = vadd.f32 0.0, %v454
    %456 = vdwg.mxu0
    %v457 = vadd.f32 %v455, %v217
    %v458 = vtanh.pop %v457
    %v459 = vmul.f32 %v458, 0.5
    %v460 = vadd.f32 %v459, 0.5
    %v461 = vsel %vm223, %v458, %v460
    %v462 = vmul.f32 %v461, %v343
    %464 = vrot.lane.b32.xlu0 %v461, 64
    %v465 = vpop.permute.xlu0 %464
    %v467 = vmul.f32 %v461, %v465
    %469 = vrot.lane.b32.xlu0 %v467, 32
    %v470 = vpop.permute.xlu0 %469
    %v472 = vadd.f32 %v462, %v470
    %v473 = vtanh.pop %v472
    %475 = vrot.lane.b32.xlu0 %v473, 64
    %v476 = vpop.permute.xlu0 %475
    %v478 = vmul.f32 %v461, %v476
    %s479 = scalar_lea.vmem [#allocation2], 16
    %v480 = vld [vmem:[%s479] sm:$0xff]
    %v481 = vadd.f32 %v480, %v453
    %v482 = vtanh.pop %v481
    %v483 = vmul.f32 %v482, 0.5
    %v484 = vadd.f32 %v483, 0.5
    %v485 = vsel %vm223, %v482, %v484
    %v486 = vmul.f32 %v485, %v367
    %488 = vrot.lane.b32.xlu0 %v485, 64
    %v489 = vpop.permute.xlu0 %488
    %v491 = vmul.f32 %v485, %v489
    %493 = vrot.lane.b32.xlu0 %v491, 32
    %v494 = vpop.permute.xlu0 %493
    %v496 = vadd.f32 %v486, %v494
    %v497 = vtanh.pop %v496
    %499 = vrot.lane.b32.xlu0 %v497, 64
    %v500 = vpop.permute.xlu0 %499
    %v502 = vmul.f32 %v485, %v500
    %504 = vrot.lane.b32.xlu0 %v502, 32
    %v505 = vpop.permute.xlu0 %504
    %508 = vrot.lane.b32.xlu0 %v478, 64
    %v509 = vpop.permute.xlu0 %508
    %v511 = vsel %vm251, %v505, %v509
    %v513 = vsel %vm253, %v511, 0
    %515 = vmatprep.subr.mxu0 0.0
    %516 = vmatpush1.msra.mxu0 0.0
    %517 = vmatprep.subr.mxu0 0.0
    %518 = vmatpush1.msra.mxu0 0.0
    %519 = vmatprep.subr.mxu0 0.0
    %520 = vmatpush1.msra.mxu0 0.0
    %521 = vmatprep.subr.mxu0 0.0
    %522 = vmatpush1.msra.mxu0 0.0
    %523 = vmatprep.subr.mxu0 0.0
    %524 = vmatpush1.msra.mxu0 0.0
    %525 = vmatprep.subr.mxu0 0.0
    %526 = vmatpush1.msra.mxu0 0.0
    %527 = vmatprep.subr.mxu0 0.0
    %528 = vmatpush1.msra.mxu0 0.0
    %529 = vmatprep.subr.mxu0 0.0
    %530 = vmatpush1.msra.mxu0 0.0
    %531 = vmatprep.subr.mxu0 %v211
    %532 = vmatpush1.msra.mxu0 %v210
    %533 = vmatprep.subr.mxu0 %v209
    %534 = vmatpush1.msra.mxu0 %v208
    %535 = vmatprep.subr.mxu0 %v207
    %536 = vmatpush1.msra.mxu0 %v206
    %537 = vmatprep.subr.mxu0 %v205
    %538 = vmatpush1.msra.mxu0 %v204
    %539 = vmatprep.subr.mxu0 %v203
    %540 = vmatpush1.msra.mxu0 %v202
    %541 = vmatprep.subr.mxu0 %v201
    %542 = vmatpush1.msra.mxu0 %v200
    %543 = vmatprep.subr.mxu0 %v199
    %544 = vmatpush1.msra.mxu0 %v198
    %545 = vmatprep.subr.mxu0 %v197
    %546 = vmatpush1.msra.mxu0 %v196
    %547 = vmatprep.subr.mxu0 0.0
    %548 = vmatpush2.msra.mxu0 0.0
    %549 = vmatprep.subr.mxu0 0.0
    %550 = vmatpush2.msra.mxu0 0.0
    %551 = vmatprep.subr.mxu0 0.0
    %552 = vmatpush2.msra.mxu0 0.0
    %553 = vmatprep.subr.mxu0 0.0
    %554 = vmatpush2.msra.mxu0 0.0
    %555 = vmatprep.subr.mxu0 0.0
    %556 = vmatpush2.msra.mxu0 0.0
    %557 = vmatprep.subr.mxu0 0.0
    %558 = vmatpush2.msra.mxu0 0.0
    %559 = vmatprep.subr.mxu0 0.0
    %560 = vmatpush2.msra.mxu0 0.0
    %561 = vmatprep.subr.mxu0 0.0
    %562 = vmatpush2.msra.mxu0 0.0
    %563 = vmatprep.subr.mxu0 0.0
    %564 = vmatpush2.msra.mxu0 0.0
    %565 = vmatprep.subr.mxu0 0.0
    %566 = vmatpush2.msra.mxu0 0.0
    %567 = vmatprep.subr.mxu0 0.0
    %568 = vmatpush2.msra.mxu0 0.0
    %569 = vmatprep.subr.mxu0 0.0
    %570 = vmatpush2.msra.mxu0 0.0
    %571 = vmatprep.subr.mxu0 0.0
    %572 = vmatpush2.msra.mxu0 0.0
    %573 = vmatprep.subr.mxu0 0.0
    %574 = vmatpush2.msra.mxu0 0.0
    %575 = vmatprep.subr.mxu0 0.0
    %576 = vmatpush2.msra.mxu0 0.0
    %577 = vmatprep.subr.mxu0 0.0
    %578 = vmatpush2.msra.mxu0 0.0
    %579 = vmatprep.mubr.f32.mxu0 0.0
    %580 = vmatmul.mubr.f32.gmra.mxu0 %v513
    %v581 = vpop.f32.mrf.mxu0
    %v582 = vadd.f32 0.0, %v581
    %v583 = vpop.f32.mrf.mxu0
    %v584 = vadd.f32 0.0, %v583
    %585 = vdwg.mxu0
    %v586 = vadd.f32 %v584, %v217
    %v587 = vtanh.pop %v586
    %v588 = vmul.f32 %v587, 0.5
    %v589 = vadd.f32 %v588, 0.5
    %v590 = vsel %vm223, %v587, %v589
    %v591 = vmul.f32 %v590, %v472
    %593 = vrot.lane.b32.xlu0 %v590, 64
    %v594 = vpop.permute.xlu0 %593
    %v596 = vmul.f32 %v590, %v594
    %598 = vrot.lane.b32.xlu0 %v596, 32
    %v599 = vpop.permute.xlu0 %598
    %v601 = vadd.f32 %v591, %v599
    %v602 = vtanh.pop %v601
    %604 = vrot.lane.b32.xlu0 %v602, 64
    %v605 = vpop.permute.xlu0 %604
    %v607 = vmul.f32 %v590, %v605
    %s608 = scalar_lea.vmem [#allocation2], 24
    %v609 = vld [vmem:[%s608] sm:$0xff]
    %v610 = vadd.f32 %v609, %v582
    %v611 = vtanh.pop %v610
    %v612 = vmul.f32 %v611, 0.5
    %v613 = vadd.f32 %v612, 0.5
    %v614 = vsel %vm223, %v611, %v613
    %v615 = vmul.f32 %v614, %v496
    %617 = vrot.lane.b32.xlu0 %v614, 64
    %v618 = vpop.permute.xlu0 %617
    %v620 = vmul.f32 %v614, %v618
    %622 = vrot.lane.b32.xlu0 %v620, 32
    %v623 = vpop.permute.xlu0 %622
    %v625 = vadd.f32 %v615, %v623
    %v626 = vtanh.pop %v625
    %628 = vrot.lane.b32.xlu0 %v626, 64
    %v629 = vpop.permute.xlu0 %628
    %v631 = vmul.f32 %v614, %v629
    %633 = vrot.lane.b32.xlu0 %v631, 32
    %v634 = vpop.permute.xlu0 %633
    %637 = vrot.lane.b32.xlu0 %v607, 64
    %v638 = vpop.permute.xlu0 %637
    %v640 = vsel %vm251, %v634, %v638
    %v642 = vsel %vm253, %v640, 0
    %644 = vmatprep.subr.mxu0 0.0
    %645 = vmatpush1.msra.mxu0 0.0
    %646 = vmatprep.subr.mxu0 0.0
    %647 = vmatpush1.msra.mxu0 0.0
    %648 = vmatprep.subr.mxu0 0.0
    %649 = vmatpush1.msra.mxu0 0.0
    %650 = vmatprep.subr.mxu0 0.0
    %651 = vmatpush1.msra.mxu0 0.0
    %652 = vmatprep.subr.mxu0 0.0
    %653 = vmatpush1.msra.mxu0 0.0
    %654 = vmatprep.subr.mxu0 0.0
    %655 = vmatpush1.msra.mxu0 0.0
    %656 = vmatprep.subr.mxu0 0.0
    %657 = vmatpush1.msra.mxu0 0.0
    %658 = vmatprep.subr.mxu0 0.0
    %659 = vmatpush1.msra.mxu0 0.0
    %660 = vmatprep.subr.mxu0 %v211
    %661 = vmatpush1.msra.mxu0 %v210
    %662 = vmatprep.subr.mxu0 %v209
    %663 = vmatpush1.msra.mxu0 %v208
    %664 = vmatprep.subr.mxu0 %v207
    %665 = vmatpush1.msra.mxu0 %v206
    %666 = vmatprep.subr.mxu0 %v205
    %667 = vmatpush1.msra.mxu0 %v204
    %668 = vmatprep.subr.mxu0 %v203
    %669 = vmatpush1.msra.mxu0 %v202
    %670 = vmatprep.subr.mxu0 %v201
    %671 = vmatpush1.msra.mxu0 %v200
    %672 = vmatprep.subr.mxu0 %v199
    %673 = vmatpush1.msra.mxu0 %v198
    %674 = vmatprep.subr.mxu0 %v197
    %675 = vmatpush1.msra.mxu0 %v196
    %676 = vmatprep.subr.mxu0 0.0
    %677 = vmatpush2.msra.mxu0 0.0
    %678 = vmatprep.subr.mxu0 0.0
    %679 = vmatpush2.msra.mxu0 0.0
    %680 = vmatprep.subr.mxu0 0.0
    %681 = vmatpush2.msra.mxu0 0.0
    %682 = vmatprep.subr.mxu0 0.0
    %683 = vmatpush2.msra.mxu0 0.0
    %684 = vmatprep.subr.mxu0 0.0
    %685 = vmatpush2.msra.mxu0 0.0
    %686 = vmatprep.subr.mxu0 0.0
    %687 = vmatpush2.msra.mxu0 0.0
    %688 = vmatprep.subr.mxu0 0.0
    %689 = vmatpush2.msra.mxu0 0.0
    %690 = vmatprep.subr.mxu0 0.0
    %691 = vmatpush2.msra.mxu0 0.0
    %692 = vmatprep.subr.mxu0 0.0
    %693 = vmatpush2.msra.mxu0 0.0
    %694 = vmatprep.subr.mxu0 0.0
    %695 = vmatpush2.msra.mxu0 0.0
    %696 = vmatprep.subr.mxu0 0.0
    %697 = vmatpush2.msra.mxu0 0.0
    %698 = vmatprep.subr.mxu0 0.0
    %699 = vmatpush2.msra.mxu0 0.0
    %700 = vmatprep.subr.mxu0 0.0
    %701 = vmatpush2.msra.mxu0 0.0
    %702 = vmatprep.subr.mxu0 0.0
    %703 = vmatpush2.msra.mxu0 0.0
    %704 = vmatprep.subr.mxu0 0.0
    %705 = vmatpush2.msra.mxu0 0.0
    %706 = vmatprep.subr.mxu0 0.0
    %707 = vmatpush2.msra.mxu0 0.0
    %708 = vmatprep.mubr.f32.mxu0 0.0
    %709 = vmatmul.mubr.f32.gmra.mxu0 %v642
    %v710 = vpop.f32.mrf.mxu0
    %v711 = vadd.f32 0.0, %v710
    %v712 = vpop.f32.mrf.mxu0
    %v713 = vadd.f32 0.0, %v712
    %714 = vdwg.mxu0
    %v715 = vadd.f32 %v713, %v217
    %v716 = vtanh.pop %v715
    %v717 = vmul.f32 %v716, 0.5
    %v718 = vadd.f32 %v717, 0.5
    %v719 = vsel %vm223, %v716, %v718
    %v720 = vmul.f32 %v719, %v601
    %722 = vrot.lane.b32.xlu0 %v719, 64
    %v723 = vpop.permute.xlu0 %722
    %v725 = vmul.f32 %v719, %v723
    %727 = vrot.lane.b32.xlu0 %v725, 32
    %v728 = vpop.permute.xlu0 %727
    %v730 = vadd.f32 %v720, %v728
    %v731 = vtanh.pop %v730
    %733 = vrot.lane.b32.xlu0 %v731, 64
    %v734 = vpop.permute.xlu0 %733
    %v736 = vmul.f32 %v719, %v734
    %s737 = scalar_lea.vmem [#allocation2], 32
    %v738 = vld [vmem:[%s737] sm:$0xff]
    %v739 = vadd.f32 %v738, %v711
    %v740 = vtanh.pop %v739
    %v741 = vmul.f32 %v740, 0.5
    %v742 = vadd.f32 %v741, 0.5
    %v743 = vsel %vm223, %v740, %v742
    %v744 = vmul.f32 %v743, %v625
    %746 = vrot.lane.b32.xlu0 %v743, 64
    %v747 = vpop.permute.xlu0 %746
    %v749 = vmul.f32 %v743, %v747
    %751 = vrot.lane.b32.xlu0 %v749, 32
    %v752 = vpop.permute.xlu0 %751
    %v754 = vadd.f32 %v744, %v752
    %v755 = vtanh.pop %v754
    %757 = vrot.lane.b32.xlu0 %v755, 64
    %v758 = vpop.permute.xlu0 %757
    %v760 = vmul.f32 %v743, %v758
    %762 = vrot.lane.b32.xlu0 %v760, 32
    %v763 = vpop.permute.xlu0 %762
    %766 = vrot.lane.b32.xlu0 %v736, 64
    %v767 = vpop.permute.xlu0 %766
    %v769 = vsel %vm251, %v763, %v767
    %v771 = vsel %vm253, %v769, 0
    %773 = vmatprep.subr.mxu0 0.0
    %774 = vmatpush1.msra.mxu0 0.0
    %775 = vmatprep.subr.mxu0 0.0
    %776 = vmatpush1.msra.mxu0 0.0
    %777 = vmatprep.subr.mxu0 0.0
    %778 = vmatpush1.msra.mxu0 0.0
    %779 = vmatprep.subr.mxu0 0.0
    %780 = vmatpush1.msra.mxu0 0.0
    %781 = vmatprep.subr.mxu0 0.0
    %782 = vmatpush1.msra.mxu0 0.0
    %783 = vmatprep.subr.mxu0 0.0
    %784 = vmatpush1.msra.mxu0 0.0
    %785 = vmatprep.subr.mxu0 0.0
    %786 = vmatpush1.msra.mxu0 0.0
    %787 = vmatprep.subr.mxu0 0.0
    %788 = vmatpush1.msra.mxu0 0.0
    %789 = vmatprep.subr.mxu0 %v211
    %790 = vmatpush1.msra.mxu0 %v210
    %791 = vmatprep.subr.mxu0 %v209
    %792 = vmatpush1.msra.mxu0 %v208
    %793 = vmatprep.subr.mxu0 %v207
    %794 = vmatpush1.msra.mxu0 %v206
    %795 = vmatprep.subr.mxu0 %v205
    %796 = vmatpush1.msra.mxu0 %v204
    %797 = vmatprep.subr.mxu0 %v203
    %798 = vmatpush1.msra.mxu0 %v202
    %799 = vmatprep.subr.mxu0 %v201
    %800 = vmatpush1.msra.mxu0 %v200
    %801 = vmatprep.subr.mxu0 %v199
    %802 = vmatpush1.msra.mxu0 %v198
    %803 = vmatprep.subr.mxu0 %v197
    %804 = vmatpush1.msra.mxu0 %v196
    %805 = vmatprep.subr.mxu0 0.0
    %806 = vmatpush2.msra.mxu0 0.0
    %807 = vmatprep.subr.mxu0 0.0
    %808 = vmatpush2.msra.mxu0 0.0
    %809 = vmatprep.subr.mxu0 0.0
    %810 = vmatpush2.msra.mxu0 0.0
    %811 = vmatprep.subr.mxu0 0.0
    %812 = vmatpush2.msra.mxu0 0.0
    %813 = vmatprep.subr.mxu0 0.0
    %814 = vmatpush2.msra.mxu0 0.0
    %815 = vmatprep.subr.mxu0 0.0
    %816 = vmatpush2.msra.mxu0 0.0
    %817 = vmatprep.subr.mxu0 0.0
    %818 = vmatpush2.msra.mxu0 0.0
    %819 = vmatprep.subr.mxu0 0.0
    %820 = vmatpush2.msra.mxu0 0.0
    %821 = vmatprep.subr.mxu0 0.0
    %822 = vmatpush2.msra.mxu0 0.0
    %823 = vmatprep.subr.mxu0 0.0
    %824 = vmatpush2.msra.mxu0 0.0
    %825 = vmatprep.subr.mxu0 0.0
    %826 = vmatpush2.msra.mxu0 0.0
    %827 = vmatprep.subr.mxu0 0.0
    %828 = vmatpush2.msra.mxu0 0.0
    %829 = vmatprep.subr.mxu0 0.0
    %830 = vmatpush2.msra.mxu0 0.0
    %831 = vmatprep.subr.mxu0 0.0
    %832 = vmatpush2.msra.mxu0 0.0
    %833 = vmatprep.subr.mxu0 0.0
    %834 = vmatpush2.msra.mxu0 0.0
    %835 = vmatprep.subr.mxu0 0.0
    %836 = vmatpush2.msra.mxu0 0.0
    %837 = vmatprep.mubr.f32.mxu0 0.0
    %838 = vmatmul.mubr.f32.gmra.mxu0 %v771
    %v839 = vpop.f32.mrf.mxu0
    %v840 = vadd.f32 0.0, %v839
    %v841 = vpop.f32.mrf.mxu0
    %v842 = vadd.f32 0.0, %v841
    %843 = vdwg.mxu0
    %v844 = vadd.f32 %v842, %v217
    %v845 = vtanh.pop %v844
    %v846 = vmul.f32 %v845, 0.5
    %v847 = vadd.f32 %v846, 0.5
    %v848 = vsel %vm223, %v845, %v847
    %v849 = vmul.f32 %v848, %v730
    %851 = vrot.lane.b32.xlu0 %v848, 64
    %v852 = vpop.permute.xlu0 %851
    %v854 = vmul.f32 %v848, %v852
    %856 = vrot.lane.b32.xlu0 %v854, 32
    %v857 = vpop.permute.xlu0 %856
    %v859 = vadd.f32 %v849, %v857
    %v860 = vtanh.pop %v859
    %862 = vrot.lane.b32.xlu0 %v860, 64
    %v863 = vpop.permute.xlu0 %862
    %v865 = vmul.f32 %v848, %v863
    %s866 = scalar_lea.vmem [#allocation2], 40
    %v867 = vld [vmem:[%s866] sm:$0xff]
    %v868 = vadd.f32 %v867, %v840
    %v869 = vtanh.pop %v868
    %v870 = vmul.f32 %v869, 0.5
    %v871 = vadd.f32 %v870, 0.5
    %v872 = vsel %vm223, %v869, %v871
    %v873 = vmul.f32 %v872, %v754
    %875 = vrot.lane.b32.xlu0 %v872, 64
    %v876 = vpop.permute.xlu0 %875
    %v878 = vmul.f32 %v872, %v876
    %880 = vrot.lane.b32.xlu0 %v878, 32
    %v881 = vpop.permute.xlu0 %880
    %v883 = vadd.f32 %v873, %v881
    %v884 = vtanh.pop %v883
    %886 = vrot.lane.b32.xlu0 %v884, 64
    %v887 = vpop.permute.xlu0 %886
    %v889 = vmul.f32 %v872, %v887
    %891 = vrot.lane.b32.xlu0 %v889, 32
    %v892 = vpop.permute.xlu0 %891
    %895 = vrot.lane.b32.xlu0 %v865, 64
    %v896 = vpop.permute.xlu0 %895
    %v898 = vsel %vm251, %v892, %v896
    %v900 = vsel %vm253, %v898, 0
    %902 = vmatprep.subr.mxu0 0.0
    %903 = vmatpush1.msra.mxu0 0.0
    %904 = vmatprep.subr.mxu0 0.0
    %905 = vmatpush1.msra.mxu0 0.0
    %906 = vmatprep.subr.mxu0 0.0
    %907 = vmatpush1.msra.mxu0 0.0
    %908 = vmatprep.subr.mxu0 0.0
    %909 = vmatpush1.msra.mxu0 0.0
    %910 = vmatprep.subr.mxu0 0.0
    %911 = vmatpush1.msra.mxu0 0.0
    %912 = vmatprep.subr.mxu0 0.0
    %913 = vmatpush1.msra.mxu0 0.0
    %914 = vmatprep.subr.mxu0 0.0
    %915 = vmatpush1.msra.mxu0 0.0
    %916 = vmatprep.subr.mxu0 0.0
    %917 = vmatpush1.msra.mxu0 0.0
    %918 = vmatprep.subr.mxu0 %v211
    %919 = vmatpush1.msra.mxu0 %v210
    %920 = vmatprep.subr.mxu0 %v209
    %921 = vmatpush1.msra.mxu0 %v208
    %922 = vmatprep.subr.mxu0 %v207
    %923 = vmatpush1.msra.mxu0 %v206
    %924 = vmatprep.subr.mxu0 %v205
    %925 = vmatpush1.msra.mxu0 %v204
    %926 = vmatprep.subr.mxu0 %v203
    %927 = vmatpush1.msra.mxu0 %v202
    %928 = vmatprep.subr.mxu0 %v201
    %929 = vmatpush1.msra.mxu0 %v200
    %930 = vmatprep.subr.mxu0 %v199
    %931 = vmatpush1.msra.mxu0 %v198
    %932 = vmatprep.subr.mxu0 %v197
    %933 = vmatpush1.msra.mxu0 %v196
    %934 = vmatprep.subr.mxu0 0.0
    %935 = vmatpush2.msra.mxu0 0.0
    %936 = vmatprep.subr.mxu0 0.0
    %937 = vmatpush2.msra.mxu0 0.0
    %938 = vmatprep.subr.mxu0 0.0
    %939 = vmatpush2.msra.mxu0 0.0
    %940 = vmatprep.subr.mxu0 0.0
    %941 = vmatpush2.msra.mxu0 0.0
    %942 = vmatprep.subr.mxu0 0.0
    %943 = vmatpush2.msra.mxu0 0.0
    %944 = vmatprep.subr.mxu0 0.0
    %945 = vmatpush2.msra.mxu0 0.0
    %946 = vmatprep.subr.mxu0 0.0
    %947 = vmatpush2.msra.mxu0 0.0
    %948 = vmatprep.subr.mxu0 0.0
    %949 = vmatpush2.msra.mxu0 0.0
    %950 = vmatprep.subr.mxu0 0.0
    %951 = vmatpush2.msra.mxu0 0.0
    %952 = vmatprep.subr.mxu0 0.0
    %953 = vmatpush2.msra.mxu0 0.0
    %954 = vmatprep.subr.mxu0 0.0
    %955 = vmatpush2.msra.mxu0 0.0
    %956 = vmatprep.subr.mxu0 0.0
    %957 = vmatpush2.msra.mxu0 0.0
    %958 = vmatprep.subr.mxu0 0.0
    %959 = vmatpush2.msra.mxu0 0.0
    %960 = vmatprep.subr.mxu0 0.0
    %961 = vmatpush2.msra.mxu0 0.0
    %962 = vmatprep.subr.mxu0 0.0
    %963 = vmatpush2.msra.mxu0 0.0
    %964 = vmatprep.subr.mxu0 0.0
    %965 = vmatpush2.msra.mxu0 0.0
    %966 = vmatprep.mubr.f32.mxu0 0.0
    %967 = vmatmul.mubr.f32.gmra.mxu0 %v900
    %v968 = vpop.f32.mrf.mxu0
    %v969 = vadd.f32 0.0, %v968
    %v970 = vpop.f32.mrf.mxu0
    %v971 = vadd.f32 0.0, %v970
    %972 = vdwg.mxu0
    %v973 = vadd.f32 %v971, %v217
    %v974 = vtanh.pop %v973
    %v975 = vmul.f32 %v974, 0.5
    %v976 = vadd.f32 %v975, 0.5
    %v977 = vsel %vm223, %v974, %v976
    %v978 = vmul.f32 %v977, %v859
    %980 = vrot.lane.b32.xlu0 %v977, 64
    %v981 = vpop.permute.xlu0 %980
    %v983 = vmul.f32 %v977, %v981
    %985 = vrot.lane.b32.xlu0 %v983, 32
    %v986 = vpop.permute.xlu0 %985
    %v988 = vadd.f32 %v978, %v986
    %v989 = vtanh.pop %v988
    %991 = vrot.lane.b32.xlu0 %v989, 64
    %v992 = vpop.permute.xlu0 %991
    %v994 = vmul.f32 %v977, %v992
    %s995 = scalar_lea.vmem [#allocation2], 48
    %v996 = vld [vmem:[%s995] sm:$0xff]
    %v997 = vadd.f32 %v996, %v969
    %v998 = vtanh.pop %v997
    %v999 = vmul.f32 %v998, 0.5
    %v1000 = vadd.f32 %v999, 0.5
    %v1001 = vsel %vm223, %v998, %v1000
    %v1002 = vmul.f32 %v1001, %v883
    %1004 = vrot.lane.b32.xlu0 %v1001, 64
    %v1005 = vpop.permute.xlu0 %1004
    %v1007 = vmul.f32 %v1001, %v1005
    %1009 = vrot.lane.b32.xlu0 %v1007, 32
    %v1010 = vpop.permute.xlu0 %1009
    %v1012 = vadd.f32 %v1002, %v1010
    %v1013 = vtanh.pop %v1012
    %1015 = vrot.lane.b32.xlu0 %v1013, 64
    %v1016 = vpop.permute.xlu0 %1015
    %v1018 = vmul.f32 %v1001, %v1016
    %1020 = vrot.lane.b32.xlu0 %v1018, 32
    %v1021 = vpop.permute.xlu0 %1020
    %1024 = vrot.lane.b32.xlu0 %v994, 64
    %v1025 = vpop.permute.xlu0 %1024
    %v1027 = vsel %vm251, %v1021, %v1025
    %v1029 = vsel %vm253, %v1027, 0
    %1031 = vmatprep.subr.mxu0 0.0
    %1032 = vmatpush1.msra.mxu0 0.0
    %1033 = vmatprep.subr.mxu0 0.0
    %1034 = vmatpush1.msra.mxu0 0.0
    %1035 = vmatprep.subr.mxu0 0.0
    %1036 = vmatpush1.msra.mxu0 0.0
    %1037 = vmatprep.subr.mxu0 0.0
    %1038 = vmatpush1.msra.mxu0 0.0
    %1039 = vmatprep.subr.mxu0 0.0
    %1040 = vmatpush1.msra.mxu0 0.0
    %1041 = vmatprep.subr.mxu0 0.0
    %1042 = vmatpush1.msra.mxu0 0.0
    %1043 = vmatprep.subr.mxu0 0.0
    %1044 = vmatpush1.msra.mxu0 0.0
    %1045 = vmatprep.subr.mxu0 0.0
    %1046 = vmatpush1.msra.mxu0 0.0
    %1047 = vmatprep.subr.mxu0 %v211
    %1048 = vmatpush1.msra.mxu0 %v210
    %1049 = vmatprep.subr.mxu0 %v209
    %1050 = vmatpush1.msra.mxu0 %v208
    %1051 = vmatprep.subr.mxu0 %v207
    %1052 = vmatpush1.msra.mxu0 %v206
    %1053 = vmatprep.subr.mxu0 %v205
    %1054 = vmatpush1.msra.mxu0 %v204
    %1055 = vmatprep.subr.mxu0 %v203
    %1056 = vmatpush1.msra.mxu0 %v202
    %1057 = vmatprep.subr.mxu0 %v201
    %1058 = vmatpush1.msra.mxu0 %v200
    %1059 = vmatprep.subr.mxu0 %v199
    %1060 = vmatpush1.msra.mxu0 %v198
    %1061 = vmatprep.subr.mxu0 %v197
    %1062 = vmatpush1.msra.mxu0 %v196
    %1063 = vmatprep.subr.mxu0 0.0
    %1064 = vmatpush2.msra.mxu0 0.0
    %1065 = vmatprep.subr.mxu0 0.0
    %1066 = vmatpush2.msra.mxu0 0.0
    %1067 = vmatprep.subr.mxu0 0.0
    %1068 = vmatpush2.msra.mxu0 0.0
    %1069 = vmatprep.subr.mxu0 0.0
    %1070 = vmatpush2.msra.mxu0 0.0
    %1071 = vmatprep.subr.mxu0 0.0
    %1072 = vmatpush2.msra.mxu0 0.0
    %1073 = vmatprep.subr.mxu0 0.0
    %1074 = vmatpush2.msra.mxu0 0.0
    %1075 = vmatprep.subr.mxu0 0.0
    %1076 = vmatpush2.msra.mxu0 0.0
    %1077 = vmatprep.subr.mxu0 0.0
    %1078 = vmatpush2.msra.mxu0 0.0
    %1079 = vmatprep.subr.mxu0 0.0
    %1080 = vmatpush2.msra.mxu0 0.0
    %1081 = vmatprep.subr.mxu0 0.0
    %1082 = vmatpush2.msra.mxu0 0.0
    %1083 = vmatprep.subr.mxu0 0.0
    %1084 = vmatpush2.msra.mxu0 0.0
    %1085 = vmatprep.subr.mxu0 0.0
    %1086 = vmatpush2.msra.mxu0 0.0
    %1087 = vmatprep.subr.mxu0 0.0
    %1088 = vmatpush2.msra.mxu0 0.0
    %1089 = vmatprep.subr.mxu0 0.0
    %1090 = vmatpush2.msra.mxu0 0.0
    %1091 = vmatprep.subr.mxu0 0.0
    %1092 = vmatpush2.msra.mxu0 0.0
    %1093 = vmatprep.subr.mxu0 0.0
    %1094 = vmatpush2.msra.mxu0 0.0
    %1095 = vmatprep.mubr.f32.mxu0 0.0
    %1096 = vmatmul.mubr.f32.gmra.mxu0 %v1029
    %v1097 = vpop.f32.mrf.mxu0
    %v1098 = vadd.f32 0.0, %v1097
    %v1099 = vpop.f32.mrf.mxu0
    %v1100 = vadd.f32 0.0, %v1099
    %1101 = vdwg.mxu0
    %v1102 = vadd.f32 %v1100, %v217
    %v1103 = vtanh.pop %v1102
    %v1104 = vmul.f32 %v1103, 0.5
    %v1105 = vadd.f32 %v1104, 0.5
    %v1106 = vsel %vm223, %v1103, %v1105
    %v1107 = vmul.f32 %v1106, %v988
    %1109 = vrot.lane.b32.xlu0 %v1106, 64
    %v1110 = vpop.permute.xlu0 %1109
    %v1112 = vmul.f32 %v1106, %v1110
    %1114 = vrot.lane.b32.xlu0 %v1112, 32
    %v1115 = vpop.permute.xlu0 %1114
    %v1117 = vadd.f32 %v1107, %v1115
    %v1118 = vtanh.pop %v1117
    %1120 = vrot.lane.b32.xlu0 %v1118, 64
    %v1121 = vpop.permute.xlu0 %1120
    %v1123 = vmul.f32 %v1106, %v1121
    %s1124 = scalar_lea.vmem [#allocation2], 56
    %v1125 = vld [vmem:[%s1124] sm:$0xff]
    %v1126 = vadd.f32 %v1125, %v1098
    %v1127 = vtanh.pop %v1126
    %v1128 = vmul.f32 %v1127, 0.5
    %v1129 = vadd.f32 %v1128, 0.5
    %v1130 = vsel %vm223, %v1127, %v1129
    %v1131 = vmul.f32 %v1130, %v1012
    %1133 = vrot.lane.b32.xlu0 %v1130, 64
    %v1134 = vpop.permute.xlu0 %1133
    %v1136 = vmul.f32 %v1130, %v1134
    %1138 = vrot.lane.b32.xlu0 %v1136, 32
    %v1139 = vpop.permute.xlu0 %1138
    %v1141 = vadd.f32 %v1131, %v1139
    %v1142 = vtanh.pop %v1141
    %1144 = vrot.lane.b32.xlu0 %v1142, 64
    %v1145 = vpop.permute.xlu0 %1144
    %v1147 = vmul.f32 %v1130, %v1145
    %1149 = vrot.lane.b32.xlu0 %v1147, 32
    %v1150 = vpop.permute.xlu0 %1149
    %1153 = vrot.lane.b32.xlu0 %v1123, 64
    %v1154 = vpop.permute.xlu0 %1153
    %v1156 = vsel %vm251, %v1150, %v1154
    %v1158 = vsel %vm253, %v1156, 0
    %1160 = vmatprep.subr.mxu0 0.0
    %1161 = vmatpush1.msra.mxu0 0.0
    %1162 = vmatprep.subr.mxu0 0.0
    %1163 = vmatpush1.msra.mxu0 0.0
    %1164 = vmatprep.subr.mxu0 0.0
    %1165 = vmatpush1.msra.mxu0 0.0
    %1166 = vmatprep.subr.mxu0 0.0
    %1167 = vmatpush1.msra.mxu0 0.0
    %1168 = vmatprep.subr.mxu0 0.0
    %1169 = vmatpush1.msra.mxu0 0.0
    %1170 = vmatprep.subr.mxu0 0.0
    %1171 = vmatpush1.msra.mxu0 0.0
    %1172 = vmatprep.subr.mxu0 0.0
    %1173 = vmatpush1.msra.mxu0 0.0
    %1174 = vmatprep.subr.mxu0 0.0
    %1175 = vmatpush1.msra.mxu0 0.0
    %1176 = vmatprep.subr.mxu0 %v211
    %1177 = vmatpush1.msra.mxu0 %v210
    %1178 = vmatprep.subr.mxu0 %v209
    %1179 = vmatpush1.msra.mxu0 %v208
    %1180 = vmatprep.subr.mxu0 %v207
    %1181 = vmatpush1.msra.mxu0 %v206
    %1182 = vmatprep.subr.mxu0 %v205
    %1183 = vmatpush1.msra.mxu0 %v204
    %1184 = vmatprep.subr.mxu0 %v203
    %1185 = vmatpush1.msra.mxu0 %v202
    %1186 = vmatprep.subr.mxu0 %v201
    %1187 = vmatpush1.msra.mxu0 %v200
    %1188 = vmatprep.subr.mxu0 %v199
    %1189 = vmatpush1.msra.mxu0 %v198
    %1190 = vmatprep.subr.mxu0 %v197
    %1191 = vmatpush1.msra.mxu0 %v196
    %1192 = vmatprep.subr.mxu0 0.0
    %1193 = vmatpush2.msra.mxu0 0.0
    %1194 = vmatprep.subr.mxu0 0.0
    %1195 = vmatpush2.msra.mxu0 0.0
    %1196 = vmatprep.subr.mxu0 0.0
    %1197 = vmatpush2.msra.mxu0 0.0
    %1198 = vmatprep.subr.mxu0 0.0
    %1199 = vmatpush2.msra.mxu0 0.0
    %1200 = vmatprep.subr.mxu0 0.0
    %1201 = vmatpush2.msra.mxu0 0.0
    %1202 = vmatprep.subr.mxu0 0.0
    %1203 = vmatpush2.msra.mxu0 0.0
    %1204 = vmatprep.subr.mxu0 0.0
    %1205 = vmatpush2.msra.mxu0 0.0
    %1206 = vmatprep.subr.mxu0 0.0
    %1207 = vmatpush2.msra.mxu0 0.0
    %1208 = vmatprep.subr.mxu0 0.0
    %1209 = vmatpush2.msra.mxu0 0.0
    %1210 = vmatprep.subr.mxu0 0.0
    %1211 = vmatpush2.msra.mxu0 0.0
    %1212 = vmatprep.subr.mxu0 0.0
    %1213 = vmatpush2.msra.mxu0 0.0
    %1214 = vmatprep.subr.mxu0 0.0
    %1215 = vmatpush2.msra.mxu0 0.0
    %1216 = vmatprep.subr.mxu0 0.0
    %1217 = vmatpush2.msra.mxu0 0.0
    %1218 = vmatprep.subr.mxu0 0.0
    %1219 = vmatpush2.msra.mxu0 0.0
    %1220 = vmatprep.subr.mxu0 0.0
    %1221 = vmatpush2.msra.mxu0 0.0
    %1222 = vmatprep.subr.mxu0 0.0
    %1223 = vmatpush2.msra.mxu0 0.0
    %1224 = vmatprep.mubr.f32.mxu0 0.0
    %1225 = vmatmul.mubr.f32.gmra.mxu0 %v1158
    %v1226 = vpop.f32.mrf.mxu0
    %v1227 = vpop.f32.mrf.mxu0
    %v1228 = vadd.f32 0.0, %v1227
    %1229 = vdwg.mxu0
    %v1230 = vadd.f32 %v1228, %v217
    %v1231 = vtanh.pop %v1230
    %v1232 = vmul.f32 %v1231, 0.5
    %v1233 = vadd.f32 %v1232, 0.5
    %v1234 = vsel %vm223, %v1231, %v1233
    %v1235 = vmul.f32 %v1234, %v1117
    %1237 = vrot.lane.b32.xlu0 %v1234, 64
    %v1238 = vpop.permute.xlu0 %1237
    %v1240 = vmul.f32 %v1234, %v1238
    %1242 = vrot.lane.b32.xlu0 %v1240, 32
    %v1243 = vpop.permute.xlu0 %1242
    %v1245 = vadd.f32 %v1235, %v1243
    %v1246 = vtanh.pop %v1245
    %1248 = vrot.lane.b32.xlu0 %v1246, 64
    %v1249 = vpop.permute.xlu0 %1248
    %v1251 = vmul.f32 %v1234, %v1249
    %v1252 = vld [vmem:[%s5] sm:$0xff]
    %v1253 = vld [vmem:[%s5 + $0x8] sm:$0xff]
    %v1254 = vld [vmem:[%s5 + $0x10] sm:$0xff]
    %v1255 = vld [vmem:[%s5 + $0x18] sm:$0xff]
    %v1256 = vld [vmem:[%s6] sm:$0x1]
    %v1258 = vlaneseq
    %v1259 = vshrl.u32 %v1258, 7
    %v1260 = vsub.s32 0, %v1259
    %v1261 = vrot.slane %v1256, %v1260
    %1264 = vrot.lane.b32.xlu0 %v1251, 32
    %v1265 = vpop.permute.xlu0 %1264
    %v1266 = vsel %vm251, %v1265, 0
    %1268 = vmatprep.subr.mxu0 0.0
    %1269 = vmatpush1.msra.mxu0 0.0
    %1270 = vmatprep.subr.mxu0 0.0
    %1271 = vmatpush1.msra.mxu0 0.0
    %1272 = vmatprep.subr.mxu0 0.0
    %1273 = vmatpush1.msra.mxu0 0.0
    %1274 = vmatprep.subr.mxu0 0.0
    %1275 = vmatpush1.msra.mxu0 0.0
    %1276 = vmatprep.subr.mxu0 0.0
    %1277 = vmatpush1.msra.mxu0 0.0
    %1278 = vmatprep.subr.mxu0 0.0
    %1279 = vmatpush1.msra.mxu0 0.0
    %1280 = vmatprep.subr.mxu0 0.0
    %1281 = vmatpush1.msra.mxu0 0.0
    %1282 = vmatprep.subr.mxu0 0.0
    %1283 = vmatpush1.msra.mxu0 0.0
    %1284 = vmatprep.subr.mxu0 0.0
    %1285 = vmatpush1.msra.mxu0 0.0
    %1286 = vmatprep.subr.mxu0 0.0
    %1287 = vmatpush1.msra.mxu0 0.0
    %1288 = vmatprep.subr.mxu0 0.0
    %1289 = vmatpush1.msra.mxu0 0.0
    %1290 = vmatprep.subr.mxu0 0.0
    %1291 = vmatpush1.msra.mxu0 0.0
    %1292 = vmatprep.subr.mxu0 0.0
    %1293 = vmatpush1.msra.mxu0 %v1255
    %1294 = vmatprep.subr.mxu0 0.0
    %1295 = vmatpush1.msra.mxu0 %v1254
    %1296 = vmatprep.subr.mxu0 0.0
    %1297 = vmatpush1.msra.mxu0 %v1253
    %1298 = vmatprep.subr.mxu0 0.0
    %1299 = vmatpush1.msra.mxu0 %v1252
    %1300 = vmatprep.subr.mxu0 0.0
    %1301 = vmatpush2.msra.mxu0 0.0
    %1302 = vmatprep.subr.mxu0 0.0
    %1303 = vmatpush2.msra.mxu0 0.0
    %1304 = vmatprep.subr.mxu0 0.0
    %1305 = vmatpush2.msra.mxu0 0.0
    %1306 = vmatprep.subr.mxu0 0.0
    %1307 = vmatpush2.msra.mxu0 0.0
    %1308 = vmatprep.subr.mxu0 0.0
    %1309 = vmatpush2.msra.mxu0 0.0
    %1310 = vmatprep.subr.mxu0 0.0
    %1311 = vmatpush2.msra.mxu0 0.0
    %1312 = vmatprep.subr.mxu0 0.0
    %1313 = vmatpush2.msra.mxu0 0.0
    %1314 = vmatprep.subr.mxu0 0.0
    %1315 = vmatpush2.msra.mxu0 0.0
    %1316 = vmatprep.subr.mxu0 0.0
    %1317 = vmatpush2.msra.mxu0 0.0
    %1318 = vmatprep.subr.mxu0 0.0
    %1319 = vmatpush2.msra.mxu0 0.0
    %1320 = vmatprep.subr.mxu0 0.0
    %1321 = vmatpush2.msra.mxu0 0.0
    %1322 = vmatprep.subr.mxu0 0.0
    %1323 = vmatpush2.msra.mxu0 0.0
    %1324 = vmatprep.subr.mxu0 0.0
    %1325 = vmatpush2.msra.mxu0 0.0
    %1326 = vmatprep.subr.mxu0 0.0
    %1327 = vmatpush2.msra.mxu0 0.0
    %1328 = vmatprep.subr.mxu0 0.0
    %1329 = vmatpush2.msra.mxu0 0.0
    %1330 = vmatprep.subr.mxu0 0.0
    %1331 = vmatpush2.msra.mxu0 0.0
    %1332 = vmatprep.mubr.f32.mxu0 0.0
    %1333 = vmatmul.mubr.f32.gmra.mxu0 %v1266
    %v1334 = vpop.f32.mrf.mxu0
    %v1335 = vadd.f32 %v1261, %v1334
    %v1336 = vpop.f32.mrf.mxu0
    %1337 = vdwg.mxu0
    %1338 = vmax.xlane.f32.xlu0 %v1335
    %v1339 = vpop.xlane.xlu0 %1338
    %v1340 = vsub.f32 %v1335, %v1339
    %v1341 = vmul.f32 %v1340, 1.442695
    %v1342 = vpow.pop %v1341
    %1343 = vadd.xlane.f32.xlu0 %v1342
    %v1344 = vpop.xlane.xlu0 %1343
    %v1345 = vrcp.pop %v1344
    %v1346 = vmul.f32 %v1342, %v1345
    %1347 = vst [vmem:[#allocation6] sm:$0xff] %v1346
    // Predicated region
    $region34: #{tpu_custom_call.1} parent=1 // pred_check
      _
    $region35: #{tpu_custom_call.1} parent=1 // pred_check_branch
      %1349 = sbr.rel (0) target = $region37
    $region36: #{tpu_custom_call.1} parent=1 // pred_region
      %s1351 = ssub.s32 128, 128
      %1352 = vsyncadd [#allocation5], %s1351
      %s1354 = sshll.u32 [#allocation6], 4
      %s1355 = int_to_ptr.vmem [resolvable:$true] %s1354
      %1357 = dma.vmem_to_hbm [thread:$0]  %s1355, 128, %s7, [#allocation5]
    $region37: #{tpu_custom_call.1} parent=1 // pred_fallthru
      _
    // Predicated region
    $region38: #{tpu_custom_call.1} parent=1 // pred_check
      _
    $region39: #{tpu_custom_call.1} parent=1 // pred_check_branch
      %1359 = sbr.rel (0) target = $region41
    $region40: #{tpu_custom_call.1} parent=1 // pred_region
      %1360 = dma.done [#allocation5], 128
    $region41: #{tpu_custom_call.1} parent=1 // pred_fallthru
      _
    %1361 = vsyncpa [#allocation4], 1
    %1362 = vsyncpa [#allocation5], 1

</llo_original>
